<compile_context>
chip_gen: v7x
topology: tpu7x:2x2x1
jax: 0.10.0
libtpu: 0.0.40
codegen_flags: <defaults>
</compile_context>

<pallas_src>
import functools

import jax
import jax.numpy as jnp
from jax.experimental import pallas as pl
from jax.experimental.pallas import tpu as pltpu


# ----------------------------------------------------------------------------
# Pallas kernel (one image per grid step)
# ----------------------------------------------------------------------------
def _decoder_block_kernel(x_ref, a1_ref, b1_ref, w1_ref, w2_ref, w3_ref, w4_ref,
                          b2_ref, a3_ref, b3_ref, out_ref, *, H, W):
    L = H * W
    C4 = a1_ref.shape[0]
    bf16, f32 = jnp.bfloat16, jnp.float32

    # --- conv1 (1x1) + folded BN1 + ReLU --------------------------------------
    y = jnp.dot(a1_ref[...], x_ref[...].astype(bf16), preferred_element_type=f32)
    y = jnp.maximum(y + b1_ref[...], 0.0)                       # (C4, L) f32

    # --- shifted views of y ----------------------------------------------------
    TAP = 4                                    # max |dh| = max |dw| of the 9 taps
    PAD = TAP * W + TAP                        # == max |dh*W + dw| over all taps
    zpad = jnp.zeros((C4, PAD), dtype=f32)
    ypad = jnp.concatenate([zpad, y, zpad], axis=1)             # (C4, L + 2*PAD)

    # Only column (dw) masks are needed: a dh overflow lands outside [0, L) in the
    # flat index and therefore reads the zero padding (this grid step sees exactly
    # one image, so there is no batch bleed either).
    w_idx = jax.lax.broadcasted_iota(jnp.int32, (1, L), 1) % W
    col_mask = {}
    for dw in range(-TAP, TAP + 1):
        if dw > 0:
            col_mask[dw] = w_idx < (W - dw)
        elif dw < 0:
            col_mask[dw] = w_idx >= (-dw)

    def shifted(dh, dw):
        """z[c, h*W + w] = y[c, h+dh, w+dw], zero outside the image."""
        if dh == 0 and dw == 0:
            return y
        off = PAD + dh * W + dw
        assert 0 <= off and off + L <= L + 2 * PAD   # PAD covers every tap offset
        z = ypad[:, off:off + L]                     # static lane slice
        if dw != 0:
            z = jnp.where(col_mask[dw], z, jnp.zeros_like(z))
        return z

    # --- deconv1..4 (+ folded BN2 scale): 4 dense branch matmuls, K = 9*C4 -----
    def branch(w_ref, taps):
        stack = jnp.concatenate([shifted(dh, dw) for dh, dw in taps], axis=0)
        return jnp.dot(w_ref[...], stack.astype(bf16), preferred_element_type=f32)

    s_taps = [4 - k for k in range(9)]                          # tap k -> shift s
    c1 = branch(w1_ref, [(0, s) for s in s_taps])               # deconv1: along W
    c2 = branch(w2_ref, [(s, 0) for s in s_taps])               # deconv2: along H
    c3 = branch(w3_ref, [(s, -s) for s in s_taps])              # deconv3 (h path)
    c4 = branch(w4_ref, [(-s, s) for s in s_taps])              # deconv4 (v path)

    cat = jnp.concatenate([c1, c2, c3, c4], axis=0)             # (Cmid_pad, L)
    cat = jnp.maximum(cat + b2_ref[...], 0.0)                   # folded BN2 + ReLU2

    # --- conv3 (1x1) + folded BN3 + ReLU ---------------------------------------
    z = jnp.dot(a3_ref[...], cat.astype(bf16), preferred_element_type=f32)
    out_ref[...] = jnp.maximum(z + b3_ref[...], 0.0)            # (NF, L)


# ----------------------------------------------------------------------------
# Host-side parameter folding / packing (layout + BN folding only, no lost FLOPs)
# ----------------------------------------------------------------------------
def _fold_bn(g, b, m, v, eps=1e-5):
    s = g / jnp.sqrt(v + eps)
    return s, b - m * s


def _pad_rows(a, mult=8):
    r = (-a.shape[0]) % mult
    return a if r == 0 else jnp.pad(a, ((0, r),) + ((0, 0),) * (a.ndim - 1))


def _pad_cols(a, mult=8):
    r = (-a.shape[1]) % mult
    return a if r == 0 else jnp.pad(a, ((0, 0), (0, r)))


def pack_params(p):
    C4, _ = p['conv1_w'].shape
    C8 = p['d1_w'].shape[1]
    C16 = p['d3_w'].shape[1]
    bf16, f32 = jnp.bfloat16, jnp.float32

    s1, t1 = _fold_bn(p['bn1_g'], p['bn1_b'], p['bn1_m'], p['bn1_v'])
    a1 = (s1[:, None] * p['conv1_w']).astype(bf16)
    b1 = (s1 * p['conv1_b'] + t1)[:, None].astype(f32)

    s2, t2 = _fold_bn(p['bn2_g'], p['bn2_b'], p['bn2_m'], p['bn2_v'])
    o = [0, C8, 2 * C8, 2 * C8 + C16, 2 * C8 + 2 * C16]        # branch row offsets

    def branch_w(w_ock, j):
        # w_ock: (C_out_branch, 9, C4); kernel stack column order is k*C4 + ci.
        w = s2[o[j]:o[j + 1], None, None] * w_ock
        return _pad_rows(w.reshape(w.shape[0], -1)).astype(bf16)

    w1 = branch_w(p['d1_w'][:, :, 0, :].transpose(1, 2, 0), 0)
    w2 = branch_w(p['d2_w'][:, :, :, 0].transpose(1, 2, 0), 1)
    w3 = branch_w(p['d3_w'][:, :, :, 0].transpose(1, 2, 0), 2)
    w4 = branch_w(p['d4_w'][:, :, 0, :].transpose(1, 2, 0), 3)

    bcat = jnp.concatenate([p['d1_b'], p['d2_b'], p['d3_b'], p['d4_b']])
    b2_full = s2 * bcat + t2
    b2 = jnp.concatenate(
        [_pad_rows(b2_full[o[j]:o[j + 1], None]) for j in range(4)]).astype(f32)

    s3, t3 = _fold_bn(p['bn3_g'], p['bn3_b'], p['bn3_m'], p['bn3_v'])
    a3_full = s3[:, None] * p['conv3_w']
    a3 = jnp.concatenate(
        [_pad_cols(a3_full[:, o[j]:o[j + 1]]) for j in range(4)], axis=1).astype(bf16)
    b3 = (s3 * p['conv3_b'] + t3)[:, None].astype(f32)
    return a1, b1, w1, w2, w3, w4, b2, a3, b3


# ----------------------------------------------------------------------------
# Forward wrapper
# ----------------------------------------------------------------------------
def decoder_forward(x, packed):
    a1, b1, w1, w2, w3, w4, b2, a3, b3 = packed
    B, Cin, H, W = x.shape
    assert H == W, "DecoderBlock1DConv4's h/v transforms (as derived) need square inputs"
    HW = H * W
    NF = a3.shape[0]

    x_flat = x.reshape(B, Cin, HW)     # trailing-dim collapse: layout-free

    def const_spec(arr):               # DMA'd once, stays VMEM-resident across grid
        return pl.BlockSpec(arr.shape, lambda b: (0, 0))

    kernel = functools.partial(_decoder_block_kernel, H=H, W=W)
    out = pl.pallas_call(
        kernel,
        out_shape=jax.ShapeDtypeStruct((B, NF, HW), jnp.float32),
        grid=(B,),
        in_specs=[pl.BlockSpec((None, Cin, HW), lambda b: (b, 0, 0)),
                  const_spec(a1), const_spec(b1),
                  const_spec(w1), const_spec(w2), const_spec(w3), const_spec(w4),
                  const_spec(b2), const_spec(a3), const_spec(b3)],
        out_specs=pl.BlockSpec((None, NF, HW), lambda b: (b, 0, 0)),
        compiler_params=pltpu.CompilerParams(
            dimension_semantics=("parallel",),
            vmem_limit_bytes=32 * 1024 * 1024),
    )(x_flat, a1, b1, w1, w2, w3, w4, b2, a3, b3)

    # 2x nearest upsample commutes with everything after the deconvs, so the kernel
    # works at low resolution and the replication is a single broadcast here.
    z = out.reshape(B, NF, H, W)
    up = jnp.broadcast_to(z[:, :, :, None, :, None], (B, NF, H, 2, W, 2))
    return up.reshape(B, NF, 2 * H, 2 * W)


# ----------------------------------------------------------------------------
# Pure-JAX reference (direct translation of the PyTorch module, eval-mode BN)
# ----------------------------------------------------------------------------
def decoder_reference(x, p, eps=1e-5):
    def bn(t, g, b, m, v):
        return ((t - m[None, :, None, None]) / jnp.sqrt(v + eps)[None, :, None, None]
                * g[None, :, None, None] + b[None, :, None, None])

    def conv1x1(t, w, b):
        return jnp.einsum('oc,bchw->bohw', w, t) + b[None, :, None, None]

    def conv_transpose(t, wt, bias, pad):   # stride-1 ConvTranspose2d, PyTorch layout
        kh, kw = int(wt.shape[2]), int(wt.shape[3])
        ph, pw = pad
        rhs = jnp.flip(wt, axis=(2, 3)).transpose(1, 0, 2, 3)   # OIHW
        out = jax.lax.conv_general_dilated(
            t, rhs, window_strides=(1, 1),
            padding=((kh - 1 - ph, kh - 1 - ph), (kw - 1 - pw, kw - 1 - pw)),
            dimension_numbers=('NCHW', 'OIHW', 'NCHW'))
        return out + bias[None, :, None, None]

    def h_transform(t):
        b, c, hh, ww = t.shape
        t = jnp.pad(t, ((0, 0), (0, 0), (0, 0), (0, ww)))
        t = t.reshape(b, c, -1)[..., :-ww]
        return t.reshape(b, c, hh, 2 * ww - 1)

    def inv_h_transform(t):
        b, c, hh, _ = t.shape
        t = t.reshape(b, c, -1)
        t = jnp.pad(t, ((0, 0), (0, 0), (0, hh)))
        return t.reshape(b, c, hh, 2 * hh)[..., :hh]

    def v_transform(t):
        t = t.transpose(0, 1, 3, 2)
        b, c, ww, hh = t.shape
        t = jnp.pad(t, ((0, 0), (0, 0), (0, 0), (0, hh)))
        t = t.reshape(b, c, -1)[..., :-hh]
        return t.reshape(b, c, ww, 2 * hh - 1).transpose(0, 1, 3, 2)

    def inv_v_transform(t):
        t = t.transpose(0, 1, 3, 2)
        b, c, ww, _ = t.shape
        t = t.reshape(b, c, -1)
        t = jnp.pad(t, ((0, 0), (0, 0), (0, ww)))
        return t.reshape(b, c, ww, 2 * ww)[..., :ww].transpose(0, 1, 3, 2)

    y = jax.nn.relu(bn(conv1x1(x, p['conv1_w'], p['conv1_b']),
                       p['bn1_g'], p['bn1_b'], p['bn1_m'], p['bn1_v']))
    x1 = conv_transpose(y, p['d1_w'], p['d1_b'], (0, 4))
    x2 = conv_transpose(y, p['d2_w'], p['d2_b'], (4, 0))
    x3 = inv_h_transform(conv_transpose(h_transform(y), p['d3_w'], p['d3_b'], (4, 0)))
    x4 = inv_v_transform(conv_transpose(v_transform(y), p['d4_w'], p['d4_b'], (0, 4)))
    cat = jnp.concatenate([x1, x2, x3, x4], axis=1)
    up = jnp.repeat(jnp.repeat(cat, 2, axis=2), 2, axis=3)      # nearest, scale 2
    z = jax.nn.relu(bn(up, p['bn2_g'], p['bn2_b'], p['bn2_m'], p['bn2_v']))
    z = conv1x1(z, p['conv3_w'], p['conv3_b'])
    return jax.nn.relu(bn(z, p['bn3_g'], p['bn3_b'], p['bn3_m'], p['bn3_v']))


# ----------------------------------------------------------------------------
# main
# ----------------------------------------------------------------------------
if __name__ == "__main__":
    B, Cin, H, W = 2, 32, 16, 16        # in_channels=32, square spatial (required)
    NF = 16                             # n_filters
    C4, C8, C16 = Cin // 4, Cin // 8, Cin // 16
    Cmid = C4 + C8

    ks = iter(jax.random.split(jax.random.PRNGKey(0), 32))

    def nrm(shape, scale=0.2):
        return scale * jax.random.normal(next(ks), shape, jnp.float32)

    def uni(shape):
        return jax.random.uniform(next(ks), shape, jnp.float32, 0.5, 1.5)

    params = dict(
        conv1_w=nrm((C4, Cin)), conv1_b=nrm((C4,)),
        bn1_g=1.0 + nrm((C4,), 0.1), bn1_b=nrm((C4,), 0.1),
        bn1_m=nrm((C4,), 0.1), bn1_v=uni((C4,)),
        d1_w=nrm((C4, C8, 1, 9)), d1_b=nrm((C8,)),
        d2_w=nrm((C4, C8, 9, 1)), d2_b=nrm((C8,)),
        d3_w=nrm((C4, C16, 9, 1)), d3_b=nrm((C16,)),
        d4_w=nrm((C4, C16, 1, 9)), d4_b=nrm((C16,)),
        bn2_g=1.0 + nrm((Cmid,), 0.1), bn2_b=nrm((Cmid,), 0.1),
        bn2_m=nrm((Cmid,), 0.1), bn2_v=uni((Cmid,)),
        conv3_w=nrm((NF, Cmid)), conv3_b=nrm((NF,)),
        bn3_g=1.0 + nrm((NF,), 0.1), bn3_b=nrm((NF,), 0.1),
        bn3_m=nrm((NF,), 0.1), bn3_v=uni((NF,)),
    )
    x = jax.random.normal(next(ks), (B, Cin, H, W), jnp.float32)

    packed = pack_params(params)
    fwd = jax.jit(decoder_forward)
    out = fwd(x, packed)
    jax.block_until_ready(out)

    ref = jax.jit(decoder_reference)(x, params)
    assert out.shape == ref.shape == (B, NF, 2 * H, 2 * W)
    # Tolerance accommodates bf16 MXU operands (f32 accumulation) in the kernel vs
    # the XLA f32-default reference; any structural error would be orders larger.
    assert bool(jnp.allclose(out, ref, atol=3e-2, rtol=3e-2)), "output mismatch"

    print("KERNEL_OK")
</pallas_src>

<mosaic_0001>
module attributes {stable_mosaic.version = 11 : i64} {
  func.func @_decoder_block_kernel(%arg0: i32, %arg1: memref<1x32x256xf32, #tpu.memory_space<vmem>>, %arg2: memref<8x32xbf16, #tpu.memory_space<vmem>>, %arg3: memref<8x1xf32, #tpu.memory_space<vmem>>, %arg4: memref<8x72xbf16, #tpu.memory_space<vmem>>, %arg5: memref<8x72xbf16, #tpu.memory_space<vmem>>, %arg6: memref<8x72xbf16, #tpu.memory_space<vmem>>, %arg7: memref<8x72xbf16, #tpu.memory_space<vmem>>, %arg8: memref<32x1xf32, #tpu.memory_space<vmem>>, %arg9: memref<16x32xbf16, #tpu.memory_space<vmem>>, %arg10: memref<16x1xf32, #tpu.memory_space<vmem>>, %arg11: memref<1x16x256xf32, #tpu.memory_space<vmem>>) attributes {dimension_semantics = [#tpu.dimension_semantics<parallel>], iteration_bounds = array<i64: 2>, scalar_prefetch = 0 : i64, scratch_operands = 0 : i64, tpu.core_type = #tpu.core_type<tc>, window_params = [{transform_indices = @transform_0, window_bounds = array<i64: 1, 32, 256>}, {pipeline_mode = #tpu.pipeline_mode<synchronous>, transform_indices = @transform_1, window_bounds = array<i64: 8, 32>}, {pipeline_mode = #tpu.pipeline_mode<synchronous>, transform_indices = @transform_2, window_bounds = array<i64: 8, 1>}, {pipeline_mode = #tpu.pipeline_mode<synchronous>, transform_indices = @transform_3, window_bounds = array<i64: 8, 72>}, {pipeline_mode = #tpu.pipeline_mode<synchronous>, transform_indices = @transform_4, window_bounds = array<i64: 8, 72>}, {pipeline_mode = #tpu.pipeline_mode<synchronous>, transform_indices = @transform_5, window_bounds = array<i64: 8, 72>}, {pipeline_mode = #tpu.pipeline_mode<synchronous>, transform_indices = @transform_6, window_bounds = array<i64: 8, 72>}, {pipeline_mode = #tpu.pipeline_mode<synchronous>, transform_indices = @transform_7, window_bounds = array<i64: 32, 1>}, {pipeline_mode = #tpu.pipeline_mode<synchronous>, transform_indices = @transform_8, window_bounds = array<i64: 16, 32>}, {pipeline_mode = #tpu.pipeline_mode<synchronous>, transform_indices = @transform_9, window_bounds = array<i64: 16, 1>}, {transform_indices = @transform_10, window_bounds = array<i64: 1, 16, 256>}]} {
    %c0 = arith.constant 0 : index
    %c0_0 = arith.constant 0 : index
    %0 = vector.load %arg2[%c0, %c0_0] : memref<8x32xbf16, #tpu.memory_space<vmem>>, vector<8x32xbf16>
    %c0_1 = arith.constant 0 : index
    %c0_2 = arith.constant 0 : index
    %c0_3 = arith.constant 0 : index
    %1 = vector.load %arg1[%c0_1, %c0_2, %c0_3] : memref<1x32x256xf32, #tpu.memory_space<vmem>>, vector<1x32x256xf32>
    %2 = vector.shape_cast %1 : vector<1x32x256xf32> to vector<32x256xf32>
    %3 = arith.truncf %2 : vector<32x256xf32> to vector<32x256xbf16>
    %cst = arith.constant dense<0.000000e+00> : vector<8x256xf32>
    %4 = tpu.matmul %0, %3, %cst {dimension_numbers = #tpu.dot_dimension_numbers<[1], [0], [0], [1], [0, 0, 1, 1], [], []>} : vector<8x32xbf16>, vector<32x256xbf16>, vector<8x256xf32> -> vector<8x256xf32>
    %c0_4 = arith.constant 0 : index
    %c0_5 = arith.constant 0 : index
    %5 = vector.load %arg3[%c0_4, %c0_5] : memref<8x1xf32, #tpu.memory_space<vmem>>, vector<8x1xf32>
    %6 = vector.broadcast %5 : vector<8x1xf32> to vector<8x256xf32>
    %7 = arith.addf %4, %6 : vector<8x256xf32>
    %cst_6 = arith.constant 0.000000e+00 : f32
    %8 = vector.broadcast %cst_6 : f32 to vector<8x256xf32>
    %9 = arith.maximumf %7, %8 : vector<8x256xf32>
    %cst_7 = arith.constant 0.000000e+00 : f32
    %10 = vector.broadcast %cst_7 : f32 to vector<8x68xf32>
    %11 = tpu.concatenate %10, %9, %10 in 1 : vector<8x68xf32>, vector<8x256xf32>, vector<8x68xf32> -> vector<8x392xf32>
    %12 = tpu.iota {dimensions = array<i32: 1>} : vector<1x256xi32>
    %c16_i32 = arith.constant 16 : i32
    %c0_i32 = arith.constant 0 : i32
    %13 = arith.cmpi eq, %c16_i32, %c0_i32 : i32
    %c1_i32 = arith.constant 1 : i32
    %14 = arith.select %13, %c1_i32, %c16_i32 : i32
    %15 = vector.broadcast %14 : i32 to vector<1x256xi32>
    %16 = arith.remsi %12, %15 : vector<1x256xi32>
    %c0_i32_8 = arith.constant 0 : i32
    %17 = vector.broadcast %c0_i32_8 : i32 to vector<1x256xi32>
    %18 = arith.cmpi ne, %16, %17 : vector<1x256xi32>
    %c0_i32_9 = arith.constant 0 : i32
    %19 = vector.broadcast %c0_i32_9 : i32 to vector<1x256xi32>
    %20 = arith.cmpi slt, %16, %19 : vector<1x256xi32>
    %c0_i32_10 = arith.constant 0 : i32
    %21 = arith.cmpi slt, %14, %c0_i32_10 : i32
    %22 = vector.broadcast %21 : i1 to vector<1x256xi1>
    %23 = vector.broadcast %22 : vector<1x256xi1> to vector<1x256xi1>
    %24 = arith.xori %20, %23 : vector<1x256xi1>
    %25 = arith.andi %24, %18 : vector<1x256xi1>
    %26 = vector.broadcast %14 : i32 to vector<1x256xi32>
    %27 = arith.addi %16, %26 : vector<1x256xi32>
    %28 = arith.select %25, %27, %16 : vector<1x256xi1>, vector<1x256xi32>
    %c4_i32 = arith.constant 4 : i32
    %29 = vector.broadcast %c4_i32 : i32 to vector<1x256xi32>
    %30 = arith.cmpi sge, %28, %29 : vector<1x256xi32>
    %c3_i32 = arith.constant 3 : i32
    %31 = vector.broadcast %c3_i32 : i32 to vector<1x256xi32>
    %32 = arith.cmpi sge, %28, %31 : vector<1x256xi32>
    %c2_i32 = arith.constant 2 : i32
    %33 = vector.broadcast %c2_i32 : i32 to vector<1x256xi32>
    %34 = arith.cmpi sge, %28, %33 : vector<1x256xi32>
    %c1_i32_11 = arith.constant 1 : i32
    %35 = vector.broadcast %c1_i32_11 : i32 to vector<1x256xi32>
    %36 = arith.cmpi sge, %28, %35 : vector<1x256xi32>
    %c15_i32 = arith.constant 15 : i32
    %37 = vector.broadcast %c15_i32 : i32 to vector<1x256xi32>
    %38 = arith.cmpi slt, %28, %37 : vector<1x256xi32>
    %c14_i32 = arith.constant 14 : i32
    %39 = vector.broadcast %c14_i32 : i32 to vector<1x256xi32>
    %40 = arith.cmpi slt, %28, %39 : vector<1x256xi32>
    %c13_i32 = arith.constant 13 : i32
    %41 = vector.broadcast %c13_i32 : i32 to vector<1x256xi32>
    %42 = arith.cmpi slt, %28, %41 : vector<1x256xi32>
    %c12_i32 = arith.constant 12 : i32
    %43 = vector.broadcast %c12_i32 : i32 to vector<1x256xi32>
    %44 = arith.cmpi slt, %28, %43 : vector<1x256xi32>
    %45 = vector.extract_strided_slice %11 {offsets = [0, 72], sizes = [8, 256], strides = [1, 1]} : vector<8x392xf32> to vector<8x256xf32>
    %cst_12 = arith.constant 0.000000e+00 : f32
    %46 = vector.broadcast %cst_12 : f32 to vector<8x256xf32>
    %47 = vector.shape_cast %44 : vector<1x256xi1> to vector<1x256xi1>
    %48 = vector.broadcast %47 : vector<1x256xi1> to vector<8x256xi1>
    %49 = arith.select %48, %45, %46 : vector<8x256xi1>, vector<8x256xf32>
    %50 = vector.extract_strided_slice %11 {offsets = [0, 71], sizes = [8, 256], strides = [1, 1]} : vector<8x392xf32> to vector<8x256xf32>
    %cst_13 = arith.constant 0.000000e+00 : f32
    %51 = vector.broadcast %cst_13 : f32 to vector<8x256xf32>
    %52 = vector.shape_cast %42 : vector<1x256xi1> to vector<1x256xi1>
    %53 = vector.broadcast %52 : vector<1x256xi1> to vector<8x256xi1>
    %54 = arith.select %53, %50, %51 : vector<8x256xi1>, vector<8x256xf32>
    %55 = vector.extract_strided_slice %11 {offsets = [0, 70], sizes = [8, 256], strides = [1, 1]} : vector<8x392xf32> to vector<8x256xf32>
    %cst_14 = arith.constant 0.000000e+00 : f32
    %56 = vector.broadcast %cst_14 : f32 to vector<8x256xf32>
    %57 = vector.shape_cast %40 : vector<1x256xi1> to vector<1x256xi1>
    %58 = vector.broadcast %57 : vector<1x256xi1> to vector<8x256xi1>
    %59 = arith.select %58, %55, %56 : vector<8x256xi1>, vector<8x256xf32>
    %60 = vector.extract_strided_slice %11 {offsets = [0, 69], sizes = [8, 256], strides = [1, 1]} : vector<8x392xf32> to vector<8x256xf32>
    %cst_15 = arith.constant 0.000000e+00 : f32
    %61 = vector.broadcast %cst_15 : f32 to vector<8x256xf32>
    %62 = vector.shape_cast %38 : vector<1x256xi1> to vector<1x256xi1>
    %63 = vector.broadcast %62 : vector<1x256xi1> to vector<8x256xi1>
    %64 = arith.select %63, %60, %61 : vector<8x256xi1>, vector<8x256xf32>
    %65 = vector.extract_strided_slice %11 {offsets = [0, 67], sizes = [8, 256], strides = [1, 1]} : vector<8x392xf32> to vector<8x256xf32>
    %cst_16 = arith.constant 0.000000e+00 : f32
    %66 = vector.broadcast %cst_16 : f32 to vector<8x256xf32>
    %67 = vector.shape_cast %36 : vector<1x256xi1> to vector<1x256xi1>
    %68 = vector.broadcast %67 : vector<1x256xi1> to vector<8x256xi1>
    %69 = arith.select %68, %65, %66 : vector<8x256xi1>, vector<8x256xf32>
    %70 = vector.extract_strided_slice %11 {offsets = [0, 66], sizes = [8, 256], strides = [1, 1]} : vector<8x392xf32> to vector<8x256xf32>
    %cst_17 = arith.constant 0.000000e+00 : f32
    %71 = vector.broadcast %cst_17 : f32 to vector<8x256xf32>
    %72 = vector.shape_cast %34 : vector<1x256xi1> to vector<1x256xi1>
    %73 = vector.broadcast %72 : vector<1x256xi1> to vector<8x256xi1>
    %74 = arith.select %73, %70, %71 : vector<8x256xi1>, vector<8x256xf32>
    %75 = vector.extract_strided_slice %11 {offsets = [0, 65], sizes = [8, 256], strides = [1, 1]} : vector<8x392xf32> to vector<8x256xf32>
    %cst_18 = arith.constant 0.000000e+00 : f32
    %76 = vector.broadcast %cst_18 : f32 to vector<8x256xf32>
    %77 = vector.shape_cast %32 : vector<1x256xi1> to vector<1x256xi1>
    %78 = vector.broadcast %77 : vector<1x256xi1> to vector<8x256xi1>
    %79 = arith.select %78, %75, %76 : vector<8x256xi1>, vector<8x256xf32>
    %80 = vector.extract_strided_slice %11 {offsets = [0, 64], sizes = [8, 256], strides = [1, 1]} : vector<8x392xf32> to vector<8x256xf32>
    %cst_19 = arith.constant 0.000000e+00 : f32
    %81 = vector.broadcast %cst_19 : f32 to vector<8x256xf32>
    %82 = vector.shape_cast %30 : vector<1x256xi1> to vector<1x256xi1>
    %83 = vector.broadcast %82 : vector<1x256xi1> to vector<8x256xi1>
    %84 = arith.select %83, %80, %81 : vector<8x256xi1>, vector<8x256xf32>
    %85 = tpu.concatenate %49, %54, %59, %64, %9, %69, %74, %79, %84 in 0 : vector<8x256xf32>, vector<8x256xf32>, vector<8x256xf32>, vector<8x256xf32>, vector<8x256xf32>, vector<8x256xf32>, vector<8x256xf32>, vector<8x256xf32>, vector<8x256xf32> -> vector<72x256xf32>
    %c0_20 = arith.constant 0 : index
    %c0_21 = arith.constant 0 : index
    %86 = vector.load %arg4[%c0_20, %c0_21] : memref<8x72xbf16, #tpu.memory_space<vmem>>, vector<8x72xbf16>
    %87 = arith.truncf %85 : vector<72x256xf32> to vector<72x256xbf16>
    %cst_22 = arith.constant dense<0.000000e+00> : vector<8x256xf32>
    %88 = tpu.matmul %86, %87, %cst_22 {dimension_numbers = #tpu.dot_dimension_numbers<[1], [0], [0], [1], [0, 0, 1, 1], [], []>} : vector<8x72xbf16>, vector<72x256xbf16>, vector<8x256xf32> -> vector<8x256xf32>
    %89 = vector.extract_strided_slice %11 {offsets = [0, 132], sizes = [8, 256], strides = [1, 1]} : vector<8x392xf32> to vector<8x256xf32>
    %90 = vector.extract_strided_slice %11 {offsets = [0, 116], sizes = [8, 256], strides = [1, 1]} : vector<8x392xf32> to vector<8x256xf32>
    %91 = vector.extract_strided_slice %11 {offsets = [0, 100], sizes = [8, 256], strides = [1, 1]} : vector<8x392xf32> to vector<8x256xf32>
    %92 = vector.extract_strided_slice %11 {offsets = [0, 84], sizes = [8, 256], strides = [1, 1]} : vector<8x392xf32> to vector<8x256xf32>
    %93 = vector.extract_strided_slice %11 {offsets = [0, 52], sizes = [8, 256], strides = [1, 1]} : vector<8x392xf32> to vector<8x256xf32>
    %94 = vector.extract_strided_slice %11 {offsets = [0, 36], sizes = [8, 256], strides = [1, 1]} : vector<8x392xf32> to vector<8x256xf32>
    %95 = vector.extract_strided_slice %11 {offsets = [0, 20], sizes = [8, 256], strides = [1, 1]} : vector<8x392xf32> to vector<8x256xf32>
    %96 = vector.extract_strided_slice %11 {offsets = [0, 4], sizes = [8, 256], strides = [1, 1]} : vector<8x392xf32> to vector<8x256xf32>
    %97 = tpu.concatenate %89, %90, %91, %92, %9, %93, %94, %95, %96 in 0 : vector<8x256xf32>, vector<8x256xf32>, vector<8x256xf32>, vector<8x256xf32>, vector<8x256xf32>, vector<8x256xf32>, vector<8x256xf32>, vector<8x256xf32>, vector<8x256xf32> -> vector<72x256xf32>
    %c0_23 = arith.constant 0 : index
    %c0_24 = arith.constant 0 : index
    %98 = vector.load %arg5[%c0_23, %c0_24] : memref<8x72xbf16, #tpu.memory_space<vmem>>, vector<8x72xbf16>
    %99 = arith.truncf %97 : vector<72x256xf32> to vector<72x256xbf16>
    %cst_25 = arith.constant dense<0.000000e+00> : vector<8x256xf32>
    %100 = tpu.matmul %98, %99, %cst_25 {dimension_numbers = #tpu.dot_dimension_numbers<[1], [0], [0], [1], [0, 0, 1, 1], [], []>} : vector<8x72xbf16>, vector<72x256xbf16>, vector<8x256xf32> -> vector<8x256xf32>
    %101 = vector.extract_strided_slice %11 {offsets = [0, 128], sizes = [8, 256], strides = [1, 1]} : vector<8x392xf32> to vector<8x256xf32>
    %cst_26 = arith.constant 0.000000e+00 : f32
    %102 = vector.broadcast %cst_26 : f32 to vector<8x256xf32>
    %103 = vector.shape_cast %30 : vector<1x256xi1> to vector<1x256xi1>
    %104 = vector.broadcast %103 : vector<1x256xi1> to vector<8x256xi1>
    %105 = arith.select %104, %101, %102 : vector<8x256xi1>, vector<8x256xf32>
    %106 = vector.extract_strided_slice %11 {offsets = [0, 113], sizes = [8, 256], strides = [1, 1]} : vector<8x392xf32> to vector<8x256xf32>
    %cst_27 = arith.constant 0.000000e+00 : f32
    %107 = vector.broadcast %cst_27 : f32 to vector<8x256xf32>
    %108 = vector.shape_cast %32 : vector<1x256xi1> to vector<1x256xi1>
    %109 = vector.broadcast %108 : vector<1x256xi1> to vector<8x256xi1>
    %110 = arith.select %109, %106, %107 : vector<8x256xi1>, vector<8x256xf32>
    %111 = vector.extract_strided_slice %11 {offsets = [0, 98], sizes = [8, 256], strides = [1, 1]} : vector<8x392xf32> to vector<8x256xf32>
    %cst_28 = arith.constant 0.000000e+00 : f32
    %112 = vector.broadcast %cst_28 : f32 to vector<8x256xf32>
    %113 = vector.shape_cast %34 : vector<1x256xi1> to vector<1x256xi1>
    %114 = vector.broadcast %113 : vector<1x256xi1> to vector<8x256xi1>
    %115 = arith.select %114, %111, %112 : vector<8x256xi1>, vector<8x256xf32>
    %116 = vector.extract_strided_slice %11 {offsets = [0, 83], sizes = [8, 256], strides = [1, 1]} : vector<8x392xf32> to vector<8x256xf32>
    %cst_29 = arith.constant 0.000000e+00 : f32
    %117 = vector.broadcast %cst_29 : f32 to vector<8x256xf32>
    %118 = vector.shape_cast %36 : vector<1x256xi1> to vector<1x256xi1>
    %119 = vector.broadcast %118 : vector<1x256xi1> to vector<8x256xi1>
    %120 = arith.select %119, %116, %117 : vector<8x256xi1>, vector<8x256xf32>
    %121 = vector.extract_strided_slice %11 {offsets = [0, 53], sizes = [8, 256], strides = [1, 1]} : vector<8x392xf32> to vector<8x256xf32>
    %cst_30 = arith.constant 0.000000e+00 : f32
    %122 = vector.broadcast %cst_30 : f32 to vector<8x256xf32>
    %123 = vector.shape_cast %38 : vector<1x256xi1> to vector<1x256xi1>
    %124 = vector.broadcast %123 : vector<1x256xi1> to vector<8x256xi1>
    %125 = arith.select %124, %121, %122 : vector<8x256xi1>, vector<8x256xf32>
    %126 = vector.extract_strided_slice %11 {offsets = [0, 38], sizes = [8, 256], strides = [1, 1]} : vector<8x392xf32> to vector<8x256xf32>
    %cst_31 = arith.constant 0.000000e+00 : f32
    %127 = vector.broadcast %cst_31 : f32 to vector<8x256xf32>
    %128 = vector.shape_cast %40 : vector<1x256xi1> to vector<1x256xi1>
    %129 = vector.broadcast %128 : vector<1x256xi1> to vector<8x256xi1>
    %130 = arith.select %129, %126, %127 : vector<8x256xi1>, vector<8x256xf32>
    %131 = vector.extract_strided_slice %11 {offsets = [0, 23], sizes = [8, 256], strides = [1, 1]} : vector<8x392xf32> to vector<8x256xf32>
    %cst_32 = arith.constant 0.000000e+00 : f32
    %132 = vector.broadcast %cst_32 : f32 to vector<8x256xf32>
    %133 = vector.shape_cast %42 : vector<1x256xi1> to vector<1x256xi1>
    %134 = vector.broadcast %133 : vector<1x256xi1> to vector<8x256xi1>
    %135 = arith.select %134, %131, %132 : vector<8x256xi1>, vector<8x256xf32>
    %136 = vector.extract_strided_slice %11 {offsets = [0, 8], sizes = [8, 256], strides = [1, 1]} : vector<8x392xf32> to vector<8x256xf32>
    %cst_33 = arith.constant 0.000000e+00 : f32
    %137 = vector.broadcast %cst_33 : f32 to vector<8x256xf32>
    %138 = vector.shape_cast %44 : vector<1x256xi1> to vector<1x256xi1>
    %139 = vector.broadcast %138 : vector<1x256xi1> to vector<8x256xi1>
    %140 = arith.select %139, %136, %137 : vector<8x256xi1>, vector<8x256xf32>
    %141 = tpu.concatenate %105, %110, %115, %120, %9, %125, %130, %135, %140 in 0 : vector<8x256xf32>, vector<8x256xf32>, vector<8x256xf32>, vector<8x256xf32>, vector<8x256xf32>, vector<8x256xf32>, vector<8x256xf32>, vector<8x256xf32>, vector<8x256xf32> -> vector<72x256xf32>
    %c0_34 = arith.constant 0 : index
    %c0_35 = arith.constant 0 : index
    %142 = vector.load %arg6[%c0_34, %c0_35] : memref<8x72xbf16, #tpu.memory_space<vmem>>, vector<8x72xbf16>
    %143 = arith.truncf %141 : vector<72x256xf32> to vector<72x256xbf16>
    %cst_36 = arith.constant dense<0.000000e+00> : vector<8x256xf32>
    %144 = tpu.matmul %142, %143, %cst_36 {dimension_numbers = #tpu.dot_dimension_numbers<[1], [0], [0], [1], [0, 0, 1, 1], [], []>} : vector<8x72xbf16>, vector<72x256xbf16>, vector<8x256xf32> -> vector<8x256xf32>
    %145 = vector.extract_strided_slice %11 {offsets = [0, 8], sizes = [8, 256], strides = [1, 1]} : vector<8x392xf32> to vector<8x256xf32>
    %cst_37 = arith.constant 0.000000e+00 : f32
    %146 = vector.broadcast %cst_37 : f32 to vector<8x256xf32>
    %147 = vector.shape_cast %44 : vector<1x256xi1> to vector<1x256xi1>
    %148 = vector.broadcast %147 : vector<1x256xi1> to vector<8x256xi1>
    %149 = arith.select %148, %145, %146 : vector<8x256xi1>, vector<8x256xf32>
    %150 = vector.extract_strided_slice %11 {offsets = [0, 23], sizes = [8, 256], strides = [1, 1]} : vector<8x392xf32> to vector<8x256xf32>
    %cst_38 = arith.constant 0.000000e+00 : f32
    %151 = vector.broadcast %cst_38 : f32 to vector<8x256xf32>
    %152 = vector.shape_cast %42 : vector<1x256xi1> to vector<1x256xi1>
    %153 = vector.broadcast %152 : vector<1x256xi1> to vector<8x256xi1>
    %154 = arith.select %153, %150, %151 : vector<8x256xi1>, vector<8x256xf32>
    %155 = vector.extract_strided_slice %11 {offsets = [0, 38], sizes = [8, 256], strides = [1, 1]} : vector<8x392xf32> to vector<8x256xf32>
    %cst_39 = arith.constant 0.000000e+00 : f32
    %156 = vector.broadcast %cst_39 : f32 to vector<8x256xf32>
    %157 = vector.shape_cast %40 : vector<1x256xi1> to vector<1x256xi1>
    %158 = vector.broadcast %157 : vector<1x256xi1> to vector<8x256xi1>
    %159 = arith.select %158, %155, %156 : vector<8x256xi1>, vector<8x256xf32>
    %160 = vector.extract_strided_slice %11 {offsets = [0, 53], sizes = [8, 256], strides = [1, 1]} : vector<8x392xf32> to vector<8x256xf32>
    %cst_40 = arith.constant 0.000000e+00 : f32
    %161 = vector.broadcast %cst_40 : f32 to vector<8x256xf32>
    %162 = vector.shape_cast %38 : vector<1x256xi1> to vector<1x256xi1>
    %163 = vector.broadcast %162 : vector<1x256xi1> to vector<8x256xi1>
    %164 = arith.select %163, %160, %161 : vector<8x256xi1>, vector<8x256xf32>
    %165 = vector.extract_strided_slice %11 {offsets = [0, 83], sizes = [8, 256], strides = [1, 1]} : vector<8x392xf32> to vector<8x256xf32>
    %cst_41 = arith.constant 0.000000e+00 : f32
    %166 = vector.broadcast %cst_41 : f32 to vector<8x256xf32>
    %167 = vector.shape_cast %36 : vector<1x256xi1> to vector<1x256xi1>
    %168 = vector.broadcast %167 : vector<1x256xi1> to vector<8x256xi1>
    %169 = arith.select %168, %165, %166 : vector<8x256xi1>, vector<8x256xf32>
    %170 = vector.extract_strided_slice %11 {offsets = [0, 98], sizes = [8, 256], strides = [1, 1]} : vector<8x392xf32> to vector<8x256xf32>
    %cst_42 = arith.constant 0.000000e+00 : f32
    %171 = vector.broadcast %cst_42 : f32 to vector<8x256xf32>
    %172 = vector.shape_cast %34 : vector<1x256xi1> to vector<1x256xi1>
    %173 = vector.broadcast %172 : vector<1x256xi1> to vector<8x256xi1>
    %174 = arith.select %173, %170, %171 : vector<8x256xi1>, vector<8x256xf32>
    %175 = vector.extract_strided_slice %11 {offsets = [0, 113], sizes = [8, 256], strides = [1, 1]} : vector<8x392xf32> to vector<8x256xf32>
    %cst_43 = arith.constant 0.000000e+00 : f32
    %176 = vector.broadcast %cst_43 : f32 to vector<8x256xf32>
    %177 = vector.shape_cast %32 : vector<1x256xi1> to vector<1x256xi1>
    %178 = vector.broadcast %177 : vector<1x256xi1> to vector<8x256xi1>
    %179 = arith.select %178, %175, %176 : vector<8x256xi1>, vector<8x256xf32>
    %180 = vector.extract_strided_slice %11 {offsets = [0, 128], sizes = [8, 256], strides = [1, 1]} : vector<8x392xf32> to vector<8x256xf32>
    %cst_44 = arith.constant 0.000000e+00 : f32
    %181 = vector.broadcast %cst_44 : f32 to vector<8x256xf32>
    %182 = vector.shape_cast %30 : vector<1x256xi1> to vector<1x256xi1>
    %183 = vector.broadcast %182 : vector<1x256xi1> to vector<8x256xi1>
    %184 = arith.select %183, %180, %181 : vector<8x256xi1>, vector<8x256xf32>
    %185 = tpu.concatenate %149, %154, %159, %164, %9, %169, %174, %179, %184 in 0 : vector<8x256xf32>, vector<8x256xf32>, vector<8x256xf32>, vector<8x256xf32>, vector<8x256xf32>, vector<8x256xf32>, vector<8x256xf32>, vector<8x256xf32>, vector<8x256xf32> -> vector<72x256xf32>
    %c0_45 = arith.constant 0 : index
    %c0_46 = arith.constant 0 : index
    %186 = vector.load %arg7[%c0_45, %c0_46] : memref<8x72xbf16, #tpu.memory_space<vmem>>, vector<8x72xbf16>
    %187 = arith.truncf %185 : vector<72x256xf32> to vector<72x256xbf16>
    %cst_47 = arith.constant dense<0.000000e+00> : vector<8x256xf32>
    %188 = tpu.matmul %186, %187, %cst_47 {dimension_numbers = #tpu.dot_dimension_numbers<[1], [0], [0], [1], [0, 0, 1, 1], [], []>} : vector<8x72xbf16>, vector<72x256xbf16>, vector<8x256xf32> -> vector<8x256xf32>
    %189 = tpu.concatenate %88, %100, %144, %188 in 0 : vector<8x256xf32>, vector<8x256xf32>, vector<8x256xf32>, vector<8x256xf32> -> vector<32x256xf32>
    %c0_48 = arith.constant 0 : index
    %c0_49 = arith.constant 0 : index
    %190 = vector.load %arg8[%c0_48, %c0_49] : memref<32x1xf32, #tpu.memory_space<vmem>>, vector<32x1xf32>
    %191 = vector.broadcast %190 : vector<32x1xf32> to vector<32x256xf32>
    %192 = arith.addf %189, %191 : vector<32x256xf32>
    %cst_50 = arith.constant 0.000000e+00 : f32
    %193 = vector.broadcast %cst_50 : f32 to vector<32x256xf32>
    %194 = arith.maximumf %192, %193 : vector<32x256xf32>
    %c0_51 = arith.constant 0 : index
    %c0_52 = arith.constant 0 : index
    %195 = vector.load %arg9[%c0_51, %c0_52] : memref<16x32xbf16, #tpu.memory_space<vmem>>, vector<16x32xbf16>
    %196 = arith.truncf %194 : vector<32x256xf32> to vector<32x256xbf16>
    %cst_53 = arith.constant dense<0.000000e+00> : vector<16x256xf32>
    %197 = tpu.matmul %195, %196, %cst_53 {dimension_numbers = #tpu.dot_dimension_numbers<[1], [0], [0], [1], [0, 0, 1, 1], [], []>} : vector<16x32xbf16>, vector<32x256xbf16>, vector<16x256xf32> -> vector<16x256xf32>
    %c0_54 = arith.constant 0 : index
    %c0_55 = arith.constant 0 : index
    %198 = vector.load %arg10[%c0_54, %c0_55] : memref<16x1xf32, #tpu.memory_space<vmem>>, vector<16x1xf32>
    %199 = vector.broadcast %198 : vector<16x1xf32> to vector<16x256xf32>
    %200 = arith.addf %197, %199 : vector<16x256xf32>
    %cst_56 = arith.constant 0.000000e+00 : f32
    %201 = vector.broadcast %cst_56 : f32 to vector<16x256xf32>
    %202 = arith.maximumf %200, %201 : vector<16x256xf32>
    %c0_57 = arith.constant 0 : index
    %c0_58 = arith.constant 0 : index
    %c0_59 = arith.constant 0 : index
    %203 = vector.load %arg11[%c0_57, %c0_58, %c0_59] : memref<1x16x256xf32, #tpu.memory_space<vmem>>, vector<1x16x256xf32>
    %204 = vector.shape_cast %203 : vector<1x16x256xf32> to vector<16x256xf32>
    %205 = vector.shape_cast %202 : vector<16x256xf32> to vector<1x16x256xf32>
    tpu.vector_store %arg11[%c0_57, %c0_58, %c0_59], %205 {strides = array<i32>} : memref<1x16x256xf32, #tpu.memory_space<vmem>>, vector<1x16x256xf32>,
    return
  }
  func.func @transform_0(%arg0: i32) -> (i32, i32, i32) {
    %c0_i32 = arith.constant 0 : i32
    %c0_i32_0 = arith.constant 0 : i32
    %c0_i32_1 = arith.constant 0 : i32
    return %arg0, %c0_i32, %c0_i32_0 : i32, i32, i32
  }
  func.func @transform_1(%arg0: i32) -> (i32, i32) {
    %c0_i32 = arith.constant 0 : i32
    %c0_i32_0 = arith.constant 0 : i32
    %c0_i32_1 = arith.constant 0 : i32
    return %c0_i32, %c0_i32_0 : i32, i32
  }
  func.func @transform_2(%arg0: i32) -> (i32, i32) {
    %c0_i32 = arith.constant 0 : i32
    %c0_i32_0 = arith.constant 0 : i32
    %c0_i32_1 = arith.constant 0 : i32
    return %c0_i32, %c0_i32_0 : i32, i32
  }
  func.func @transform_3(%arg0: i32) -> (i32, i32) {
    %c0_i32 = arith.constant 0 : i32
    %c0_i32_0 = arith.constant 0 : i32
    %c0_i32_1 = arith.constant 0 : i32
    return %c0_i32, %c0_i32_0 : i32, i32
  }
  func.func @transform_4(%arg0: i32) -> (i32, i32) {
    %c0_i32 = arith.constant 0 : i32
    %c0_i32_0 = arith.constant 0 : i32
    %c0_i32_1 = arith.constant 0 : i32
    return %c0_i32, %c0_i32_0 : i32, i32
  }
  func.func @transform_5(%arg0: i32) -> (i32, i32) {
    %c0_i32 = arith.constant 0 : i32
    %c0_i32_0 = arith.constant 0 : i32
    %c0_i32_1 = arith.constant 0 : i32
    return %c0_i32, %c0_i32_0 : i32, i32
  }
  func.func @transform_6(%arg0: i32) -> (i32, i32) {
    %c0_i32 = arith.constant 0 : i32
    %c0_i32_0 = arith.constant 0 : i32
    %c0_i32_1 = arith.constant 0 : i32
    return %c0_i32, %c0_i32_0 : i32, i32
  }
  func.func @transform_7(%arg0: i32) -> (i32, i32) {
    %c0_i32 = arith.constant 0 : i32
    %c0_i32_0 = arith.constant 0 : i32
    %c0_i32_1 = arith.constant 0 : i32
    return %c0_i32, %c0_i32_0 : i32, i32
  }
  func.func @transform_8(%arg0: i32) -> (i32, i32) {
    %c0_i32 = arith.constant 0 : i32
    %c0_i32_0 = arith.constant 0 : i32
    %c0_i32_1 = arith.constant 0 : i32
    return %c0_i32, %c0_i32_0 : i32, i32
  }
  func.func @transform_9(%arg0: i32) -> (i32, i32) {
    %c0_i32 = arith.constant 0 : i32
    %c0_i32_0 = arith.constant 0 : i32
    %c0_i32_1 = arith.constant 0 : i32
    return %c0_i32, %c0_i32_0 : i32, i32
  }
  func.func @transform_10(%arg0: i32) -> (i32, i32, i32) {
    %c0_i32 = arith.constant 0 : i32
    %c0_i32_0 = arith.constant 0 : i32
    %c0_i32_1 = arith.constant 0 : i32
    return %arg0, %c0_i32, %c0_i32_0 : i32, i32, i32
  }
}

</mosaic_0001>

<llo_original>
// kernel: decoder_forward.1
$region0: #{decoder_forward.1}
  #allocation0 [shape = 'u32[]', space=smem, size = 0x4, offset = 0x4, fixed_abs, tag = 'smem constant byte address 0x4 - core index']
  #allocation1 [shape = 'u32[144,128]{1,0:T(1,128)}', space=vmem, size = 0x12000, scoped, tag = 'internal scratch']
  %s0 = inlined_call_operand.vmem [shape: f32[2,32,256], index: 0, kind: input, shape index: {}]
  %s1 = inlined_call_operand.vmem [shape: bf16[8,32], index: 1, kind: input, shape index: {}]
  %s2 = inlined_call_operand.vmem [shape: f32[8,1], index: 2, kind: input, shape index: {}]
  %s3 = inlined_call_operand.vmem [shape: bf16[8,72], index: 3, kind: input, shape index: {}]
  %s4 = inlined_call_operand.vmem [shape: bf16[8,72], index: 4, kind: input, shape index: {}]
  %s5 = inlined_call_operand.vmem [shape: bf16[8,72], index: 5, kind: input, shape index: {}]
  %s6 = inlined_call_operand.vmem [shape: bf16[8,72], index: 6, kind: input, shape index: {}]
  %s7 = inlined_call_operand.vmem [shape: f32[32,1], index: 7, kind: input, shape index: {}]
  %s8 = inlined_call_operand.vmem [shape: bf16[16,32], index: 8, kind: input, shape index: {}]
  %s9 = inlined_call_operand.vmem [shape: f32[16,1], index: 9, kind: input, shape index: {}]
  %s10 = inlined_call_operand.vmem [shape: f32[2,16,256], index: 10, kind: output, shape index: {}]
  %s11 = sld [smem:[#allocation0]]
  $region73: #{decoder_forward.1} parent=0
    _
  %s13 = ssub.s32 1, %s11
  %s14 = scalar_select 0, %s13, %s11
  loop: start=0, step=1, limit=4
  $region2: #{decoder_forward.1} parent=0 // loop_pre_header
    _
  $region3: #{decoder_forward.1} parent=0 // loop_header
    %s16 = sphi 0, %s20
    %p17 = scmp.ge.s32.totalorder %s16, 4
    %s26 = sphi 0, %s28
    %s29 = sphi 0, %s26
    %s30 = sphi 0, %s29
    %s46 = sphi 0, %s30
    %s50 = sphi 0, %s50
    %s52 = sphi 0, %s50
    %s53 = sphi 0, %s52
    %s67 = sphi 0, %s53
    %s71 = sphi 0, %s71
    %s73 = sphi 0, %s71
    %s74 = sphi 0, %s73
    %s88 = sphi 0, %s74
    %s92 = sphi 0, %s92
    %s94 = sphi 0, %s92
    %s95 = sphi 0, %s94
    %s109 = sphi 0, %s95
    %s113 = sphi 0, %s113
    %s115 = sphi 0, %s113
    %s116 = sphi 0, %s115
    %s130 = sphi 0, %s116
    %s134 = sphi 0, %s134
    %s136 = sphi 0, %s134
    %s137 = sphi 0, %s136
    %s151 = sphi 0, %s137
    %s155 = sphi 0, %s155
    %s157 = sphi 0, %s155
    %s158 = sphi 0, %s157
    %s172 = sphi 0, %s158
    %s176 = sphi 0, %s176
    %s178 = sphi 0, %s176
    %s179 = sphi 0, %s178
    %s193 = sphi 0, %s179
    %s197 = sphi 0, %s197
    %s199 = sphi 0, %s197
    %s200 = sphi 0, %s199
    %s214 = sphi 0, %s200
    %s218 = sphi 0, %s218
    %s220 = sphi 0, %s218
    %s221 = sphi 0, %s220
    %s235 = sphi 0, %s221
    %s241 = sphi 0, %s243
    %s244 = sphi 0, %s241
    %s245 = sphi 0, %s244
    %s261 = sphi 0, %s245
  $region4: #{decoder_forward.1} parent=0 // loop_header_branch
    %19 = sbr.rel (%p17) target = $region8
  $region5: #{decoder_forward.1} parent=0 // loop_body
    %s21 = ssub.s32 %s16, 1
    %s22 = ssub.s32 %s16, 2
    %s23 = sadd.s32 %s16, 1
    %s24 = ssub.s32 %s16, %s23
    %p25 = scmp.eq.s32.totalorder %s24, 0
    %s27 = sadd.s32 %s26, 1
    %s28 = scalar_select %p25, %s26, %s27
    %p31 = pneg %p25
    %p32 = scmp.eq.s32.totalorder %s16, 1
    %p33 = por %p31, %p32
    %p34 = scmp.ne.s32.totalorder %s26, %s29
    %p35 = scmp.eq.s32.totalorder %s16, 0
    %p36 = por %p34, %p35
    %p37 = scmp.ne.s32.totalorder %s26, %s29
    %p38 = scmp.eq.s32.totalorder %s21, 1
    %p39 = por %p37, %p38
    %p40 = scmp.ne.s32.totalorder %s29, %s30
    %p41 = scmp.eq.s32.totalorder %s21, 0
    %p42 = por %p40, %p41
    %p43 = scmp.ne.s32.totalorder %s29, %s30
    %p44 = scmp.eq.s32.totalorder %s22, 1
    %p45 = por %p43, %p44
    %p47 = scmp.ne.s32.totalorder %s30, %s46
    %p48 = scmp.eq.s32.totalorder %s22, 0
    %p49 = por %p47, %p48
    %s51 = sadd.s32 %s50, 1
    %p54 = scmp.eq.s32.totalorder %s16, 1
    %p55 = scmp.ne.s32.totalorder %s50, %s52
    %p56 = scmp.eq.s32.totalorder %s16, 0
    %p57 = por %p55, %p56
    %p58 = scmp.ne.s32.totalorder %s50, %s52
    %p59 = scmp.eq.s32.totalorder %s21, 1
    %p60 = por %p58, %p59
    %p61 = scmp.ne.s32.totalorder %s52, %s53
    %p62 = scmp.eq.s32.totalorder %s21, 0
    %p63 = por %p61, %p62
    %p64 = scmp.ne.s32.totalorder %s52, %s53
    %p65 = scmp.eq.s32.totalorder %s22, 1
    %p66 = por %p64, %p65
    %p68 = scmp.ne.s32.totalorder %s53, %s67
    %p69 = scmp.eq.s32.totalorder %s22, 0
    %p70 = por %p68, %p69
    %s72 = sadd.s32 %s71, 1
    %p75 = scmp.eq.s32.totalorder %s16, 1
    %p76 = scmp.ne.s32.totalorder %s71, %s73
    %p77 = scmp.eq.s32.totalorder %s16, 0
    %p78 = por %p76, %p77
    %p79 = scmp.ne.s32.totalorder %s71, %s73
    %p80 = scmp.eq.s32.totalorder %s21, 1
    %p81 = por %p79, %p80
    %p82 = scmp.ne.s32.totalorder %s73, %s74
    %p83 = scmp.eq.s32.totalorder %s21, 0
    %p84 = por %p82, %p83
    %p85 = scmp.ne.s32.totalorder %s73, %s74
    %p86 = scmp.eq.s32.totalorder %s22, 1
    %p87 = por %p85, %p86
    %p89 = scmp.ne.s32.totalorder %s74, %s88
    %p90 = scmp.eq.s32.totalorder %s22, 0
    %p91 = por %p89, %p90
    %s93 = sadd.s32 %s92, 1
    %p96 = scmp.eq.s32.totalorder %s16, 1
    %p97 = scmp.ne.s32.totalorder %s92, %s94
    %p98 = scmp.eq.s32.totalorder %s16, 0
    %p99 = por %p97, %p98
    %p100 = scmp.ne.s32.totalorder %s92, %s94
    %p101 = scmp.eq.s32.totalorder %s21, 1
    %p102 = por %p100, %p101
    %p103 = scmp.ne.s32.totalorder %s94, %s95
    %p104 = scmp.eq.s32.totalorder %s21, 0
    %p105 = por %p103, %p104
    %p106 = scmp.ne.s32.totalorder %s94, %s95
    %p107 = scmp.eq.s32.totalorder %s22, 1
    %p108 = por %p106, %p107
    %p110 = scmp.ne.s32.totalorder %s95, %s109
    %p111 = scmp.eq.s32.totalorder %s22, 0
    %p112 = por %p110, %p111
    %s114 = sadd.s32 %s113, 1
    %p117 = scmp.eq.s32.totalorder %s16, 1
    %p118 = scmp.ne.s32.totalorder %s113, %s115
    %p119 = scmp.eq.s32.totalorder %s16, 0
    %p120 = por %p118, %p119
    %p121 = scmp.ne.s32.totalorder %s113, %s115
    %p122 = scmp.eq.s32.totalorder %s21, 1
    %p123 = por %p121, %p122
    %p124 = scmp.ne.s32.totalorder %s115, %s116
    %p125 = scmp.eq.s32.totalorder %s21, 0
    %p126 = por %p124, %p125
    %p127 = scmp.ne.s32.totalorder %s115, %s116
    %p128 = scmp.eq.s32.totalorder %s22, 1
    %p129 = por %p127, %p128
    %p131 = scmp.ne.s32.totalorder %s116, %s130
    %p132 = scmp.eq.s32.totalorder %s22, 0
    %p133 = por %p131, %p132
    %s135 = sadd.s32 %s134, 1
    %p138 = scmp.eq.s32.totalorder %s16, 1
    %p139 = scmp.ne.s32.totalorder %s134, %s136
    %p140 = scmp.eq.s32.totalorder %s16, 0
    %p141 = por %p139, %p140
    %p142 = scmp.ne.s32.totalorder %s134, %s136
    %p143 = scmp.eq.s32.totalorder %s21, 1
    %p144 = por %p142, %p143
    %p145 = scmp.ne.s32.totalorder %s136, %s137
    %p146 = scmp.eq.s32.totalorder %s21, 0
    %p147 = por %p145, %p146
    %p148 = scmp.ne.s32.totalorder %s136, %s137
    %p149 = scmp.eq.s32.totalorder %s22, 1
    %p150 = por %p148, %p149
    %p152 = scmp.ne.s32.totalorder %s137, %s151
    %p153 = scmp.eq.s32.totalorder %s22, 0
    %p154 = por %p152, %p153
    %s156 = sadd.s32 %s155, 1
    %p159 = scmp.eq.s32.totalorder %s16, 1
    %p160 = scmp.ne.s32.totalorder %s155, %s157
    %p161 = scmp.eq.s32.totalorder %s16, 0
    %p162 = por %p160, %p161
    %p163 = scmp.ne.s32.totalorder %s155, %s157
    %p164 = scmp.eq.s32.totalorder %s21, 1
    %p165 = por %p163, %p164
    %p166 = scmp.ne.s32.totalorder %s157, %s158
    %p167 = scmp.eq.s32.totalorder %s21, 0
    %p168 = por %p166, %p167
    %p169 = scmp.ne.s32.totalorder %s157, %s158
    %p170 = scmp.eq.s32.totalorder %s22, 1
    %p171 = por %p169, %p170
    %p173 = scmp.ne.s32.totalorder %s158, %s172
    %p174 = scmp.eq.s32.totalorder %s22, 0
    %p175 = por %p173, %p174
    %s177 = sadd.s32 %s176, 1
    %p180 = scmp.eq.s32.totalorder %s16, 1
    %p181 = scmp.ne.s32.totalorder %s176, %s178
    %p182 = scmp.eq.s32.totalorder %s16, 0
    %p183 = por %p181, %p182
    %p184 = scmp.ne.s32.totalorder %s176, %s178
    %p185 = scmp.eq.s32.totalorder %s21, 1
    %p186 = por %p184, %p185
    %p187 = scmp.ne.s32.totalorder %s178, %s179
    %p188 = scmp.eq.s32.totalorder %s21, 0
    %p189 = por %p187, %p188
    %p190 = scmp.ne.s32.totalorder %s178, %s179
    %p191 = scmp.eq.s32.totalorder %s22, 1
    %p192 = por %p190, %p191
    %p194 = scmp.ne.s32.totalorder %s179, %s193
    %p195 = scmp.eq.s32.totalorder %s22, 0
    %p196 = por %p194, %p195
    %s198 = sadd.s32 %s197, 1
    %p201 = scmp.eq.s32.totalorder %s16, 1
    %p202 = scmp.ne.s32.totalorder %s197, %s199
    %p203 = scmp.eq.s32.totalorder %s16, 0
    %p204 = por %p202, %p203
    %p205 = scmp.ne.s32.totalorder %s197, %s199
    %p206 = scmp.eq.s32.totalorder %s21, 1
    %p207 = por %p205, %p206
    %p208 = scmp.ne.s32.totalorder %s199, %s200
    %p209 = scmp.eq.s32.totalorder %s21, 0
    %p210 = por %p208, %p209
    %p211 = scmp.ne.s32.totalorder %s199, %s200
    %p212 = scmp.eq.s32.totalorder %s22, 1
    %p213 = por %p211, %p212
    %p215 = scmp.ne.s32.totalorder %s200, %s214
    %p216 = scmp.eq.s32.totalorder %s22, 0
    %p217 = por %p215, %p216
    %s219 = sadd.s32 %s218, 1
    %p222 = scmp.eq.s32.totalorder %s16, 1
    %p223 = scmp.ne.s32.totalorder %s218, %s220
    %p224 = scmp.eq.s32.totalorder %s16, 0
    %p225 = por %p223, %p224
    %p226 = scmp.ne.s32.totalorder %s218, %s220
    %p227 = scmp.eq.s32.totalorder %s21, 1
    %p228 = por %p226, %p227
    %p229 = scmp.ne.s32.totalorder %s220, %s221
    %p230 = scmp.eq.s32.totalorder %s21, 0
    %p231 = por %p229, %p230
    %p232 = scmp.ne.s32.totalorder %s220, %s221
    %p233 = scmp.eq.s32.totalorder %s22, 1
    %p234 = por %p232, %p233
    %p236 = scmp.ne.s32.totalorder %s221, %s235
    %p237 = scmp.eq.s32.totalorder %s22, 0
    %p238 = por %p236, %p237
    %s239 = ssub.s32 %s16, %s23
    %p240 = scmp.eq.s32.totalorder %s239, 0
    %s242 = sadd.s32 %s241, 1
    %s243 = scalar_select %p240, %s241, %s242
    %p246 = pneg %p240
    %p247 = scmp.eq.s32.totalorder %s16, 1
    %p248 = por %p246, %p247
    %p249 = scmp.ne.s32.totalorder %s241, %s244
    %p250 = scmp.eq.s32.totalorder %s16, 0
    %p251 = por %p249, %p250
    %p252 = scmp.ne.s32.totalorder %s241, %s244
    %p253 = scmp.eq.s32.totalorder %s21, 1
    %p254 = por %p252, %p253
    %p255 = scmp.ne.s32.totalorder %s244, %s245
    %p256 = scmp.eq.s32.totalorder %s21, 0
    %p257 = por %p255, %p256
    %p258 = scmp.ne.s32.totalorder %s244, %s245
    %p259 = scmp.eq.s32.totalorder %s22, 1
    %p260 = por %p258, %p259
    %p262 = scmp.ne.s32.totalorder %s245, %s261
    %p263 = scmp.eq.s32.totalorder %s22, 0
    %p264 = por %p262, %p263
    %p265 = scmp.le.s32.totalorder 1, %s16
    %p266 = scmp.lt.s32.totalorder %s16, 3
    %p267 = pnand %p265, %p266
    %p268 = pneg %p267
    // Predicated region
    $region9: #{decoder_forward.1} parent=5 // pred_check
      _
    $region10: #{decoder_forward.1} parent=5 // pred_check_branch
      %270 = sbr.rel (%p267) target = $region12
    $region11: #{decoder_forward.1} parent=5 // pred_region
      %s271 = ssub.s32 %s16, 1
      // Predicated region
      $region13: #{decoder_forward.1} parent=11 // pred_check
        %p272 = pneg %p63
      $region14: #{decoder_forward.1} parent=11 // pred_check_branch
        %274 = sbr.rel (%p272) target = $region16
      $region15: #{decoder_forward.1} parent=11 // pred_region
        _
      $region16: #{decoder_forward.1} parent=11 // pred_fallthru
        _
      // Predicated region
      $region17: #{decoder_forward.1} parent=11 // pred_check
        %p275 = pneg %p84
      $region18: #{decoder_forward.1} parent=11 // pred_check_branch
        %277 = sbr.rel (%p275) target = $region20
      $region19: #{decoder_forward.1} parent=11 // pred_region
        _
      $region20: #{decoder_forward.1} parent=11 // pred_fallthru
        _
      // Predicated region
      $region21: #{decoder_forward.1} parent=11 // pred_check
        %p278 = pneg %p105
      $region22: #{decoder_forward.1} parent=11 // pred_check_branch
        %280 = sbr.rel (%p278) target = $region24
      $region23: #{decoder_forward.1} parent=11 // pred_region
        _
      $region24: #{decoder_forward.1} parent=11 // pred_fallthru
        _
      // Predicated region
      $region25: #{decoder_forward.1} parent=11 // pred_check
        %p281 = pneg %p126
      $region26: #{decoder_forward.1} parent=11 // pred_check_branch
        %283 = sbr.rel (%p281) target = $region28
      $region27: #{decoder_forward.1} parent=11 // pred_region
        _
      $region28: #{decoder_forward.1} parent=11 // pred_fallthru
        _
      // Predicated region
      $region29: #{decoder_forward.1} parent=11 // pred_check
        %p284 = pneg %p147
      $region30: #{decoder_forward.1} parent=11 // pred_check_branch
        %286 = sbr.rel (%p284) target = $region32
      $region31: #{decoder_forward.1} parent=11 // pred_region
        _
      $region32: #{decoder_forward.1} parent=11 // pred_fallthru
        _
      // Predicated region
      $region33: #{decoder_forward.1} parent=11 // pred_check
        %p287 = pneg %p168
      $region34: #{decoder_forward.1} parent=11 // pred_check_branch
        %289 = sbr.rel (%p287) target = $region36
      $region35: #{decoder_forward.1} parent=11 // pred_region
        _
      $region36: #{decoder_forward.1} parent=11 // pred_fallthru
        _
      // Predicated region
      $region37: #{decoder_forward.1} parent=11 // pred_check
        %p290 = pneg %p189
      $region38: #{decoder_forward.1} parent=11 // pred_check_branch
        %292 = sbr.rel (%p290) target = $region40
      $region39: #{decoder_forward.1} parent=11 // pred_region
        _
      $region40: #{decoder_forward.1} parent=11 // pred_fallthru
        _
      // Predicated region
      $region41: #{decoder_forward.1} parent=11 // pred_check
        %p293 = pneg %p210
      $region42: #{decoder_forward.1} parent=11 // pred_check_branch
        %295 = sbr.rel (%p293) target = $region44
      $region43: #{decoder_forward.1} parent=11 // pred_region
        _
      $region44: #{decoder_forward.1} parent=11 // pred_fallthru
        _
      // Predicated region
      $region45: #{decoder_forward.1} parent=11 // pred_check
        %p296 = pneg %p231
      $region46: #{decoder_forward.1} parent=11 // pred_check_branch
        %298 = sbr.rel (%p296) target = $region48
      $region47: #{decoder_forward.1} parent=11 // pred_region
        _
      $region48: #{decoder_forward.1} parent=11 // pred_fallthru
        _
    $region12: #{decoder_forward.1} parent=5 // pred_fallthru
      _
    %p299 = scmp.lt.s32.totalorder %s16, 2
    // Predicated region
    $region49: #{decoder_forward.1} parent=5 // pred_check
      %p300 = pneg %p299
    $region50: #{decoder_forward.1} parent=5 // pred_check_branch
      %302 = sbr.rel (%p300) target = $region52
    $region51: #{decoder_forward.1} parent=5 // pred_region
      // Predicated region
      $region53: #{decoder_forward.1} parent=51 // pred_check
        %p303 = pneg %p36
      $region54: #{decoder_forward.1} parent=51 // pred_check_branch
        %305 = sbr.rel (%p303) target = $region56
      $region55: #{decoder_forward.1} parent=51 // pred_region
        %p306 = scmp.lt.s32.totalorder %s16, 1
        %s307 = scalar_select %p306, %s16, 1
        %s308 = smul.addr %s307, 8
        %s309 = smul.addr %s308, 8
        %s310 = scalar_lea.vmem %s0, %s309
      $region56: #{decoder_forward.1} parent=51 // pred_fallthru
        _
    $region52: #{decoder_forward.1} parent=5 // pred_fallthru
      _
    %p311 = scmp.le.s32.totalorder 1, %s16
    %p312 = scmp.lt.s32.totalorder %s16, 3
    %p313 = pnand %p311, %p312
    %p314 = pneg %p313
    // Predicated region
    $region57: #{decoder_forward.1} parent=5 // pred_check
      _
    $region58: #{decoder_forward.1} parent=5 // pred_check_branch
      %316 = sbr.rel (%p313) target = $region60
    $region59: #{decoder_forward.1} parent=5 // pred_region
      %s317 = ssub.s32 %s16, 1
      %p318 = scmp.lt.s32.totalorder %s21, 1
      %s319 = scalar_select %p318, %s21, 1
      %s320 = smul.addr %s319, 8
      %s321 = smul.addr %s320, 8
      %s322 = scalar_lea.vmem %s0, %s321
      %p323 = pneg %p42
      %p324 = pneg %p39
      %p325 = pneg %p63
      %p326 = pneg %p60
      %p327 = pneg %p84
      %p328 = pneg %p81
      %p329 = pneg %p105
      %p330 = pneg %p102
      %p331 = pneg %p126
      %p332 = pneg %p123
      %p333 = pneg %p147
      %p334 = pneg %p144
      %p335 = pneg %p168
      %p336 = pneg %p165
      %p337 = pneg %p189
      %p338 = pneg %p186
      %p339 = pneg %p210
      %p340 = pneg %p207
      %p341 = pneg %p231
      %p342 = pneg %p228
      %p343 = pneg %p257
      %p344 = pneg %p254
      %p345 = scmp.lt.s32.totalorder %s21, 1
      %s346 = scalar_select %p345, %s21, 1
      %s347 = smul.addr %s346, 4
      %s348 = smul.addr %s347, 8
      %s349 = scalar_lea.vmem %s10, %s348
      %p350 = scmp.lt.s32.totalorder %s21, 1
      %s351 = scalar_select %p350, %s21, 1
      %s352 = smul.addr %s351, 8
      %s353 = smul.addr %s352, 8
      %s354 = scalar_lea.vmem %s0, %s353
      %p355 = scmp.lt.s32.totalorder %s21, 1
      %s356 = scalar_select %p355, %s21, 1
      %s357 = smul.addr %s356, 4
      %s358 = smul.addr %s357, 8
      %s359 = scalar_lea.vmem %s10, %s358
      %v361 = vld [vmem:[%s1] sm:$0xf]
      %v362 = vld [vmem:[%s354] sm:$0xff]
      %v363 = vld [vmem:[%s354 + $0x8] sm:$0xff]
      %v364 = vld [vmem:[%s354 + $0x10] sm:$0xff]
      %v365 = vld [vmem:[%s354 + $0x18] sm:$0xff]
      %v366 = vld [vmem:[%s354 + $0x20] sm:$0xff]
      %v367 = vld [vmem:[%s354 + $0x28] sm:$0xff]
      %v368 = vld [vmem:[%s354 + $0x30] sm:$0xff]
      %v369 = vld [vmem:[%s354 + $0x38] sm:$0xff]
      %v370 = vpack.c.bf16 %v364, %v362
      %v371 = vpack.c.bf16 %v365, %v363
      %v372 = vpack.c.bf16 %v368, %v366
      %v373 = vpack.c.bf16 %v369, %v367
      %v374 = vld [vmem:[%s2] sm:$0xff]
      %376 = vset.pattern.permute.xlu0 0
      %377 = vperm.xlu0 %376, %v374
      %v378 = vpop.permute.xlu0 %377
      %vm380 = vcmask 261120
      %v382 = vsel %vm380, %v361, 0
      %384 = vmatprep.subr.bf16.mxu0 %v371
      %385 = vmatpush1.bf16.msra.mxu0 %v370
      %386 = vmatprep.subr.bf16.mxu0 %v373
      %387 = vmatpush1.bf16.msra.mxu0 %v372
      %388 = vmatprep.subr.bf16.mxu0 0
      %389 = vmatpush1.bf16.msra.mxu0 0
      %390 = vmatprep.subr.bf16.mxu0 0
      %391 = vmatpush1.bf16.msra.mxu0 0
      %392 = vmatprep.subr.bf16.mxu0 0
      %393 = vmatpush1.bf16.msra.mxu0 0
      %394 = vmatprep.subr.bf16.mxu0 0
      %395 = vmatpush1.bf16.msra.mxu0 0
      %396 = vmatprep.subr.bf16.mxu0 0
      %397 = vmatpush1.bf16.msra.mxu0 0
      %398 = vmatprep.subr.bf16.mxu0 0
      %399 = vmatpush1.bf16.msra.mxu0 0
      %400 = vmatprep.subr.bf16.mxu0 0
      %401 = vmatpush1.bf16.msra.mxu0 0
      %402 = vmatprep.subr.bf16.mxu0 0
      %403 = vmatpush1.bf16.msra.mxu0 0
      %404 = vmatprep.subr.bf16.mxu0 0
      %405 = vmatpush1.bf16.msra.mxu0 0
      %406 = vmatprep.subr.bf16.mxu0 0
      %407 = vmatpush1.bf16.msra.mxu0 0
      %408 = vmatprep.subr.bf16.mxu0 0
      %409 = vmatpush1.bf16.msra.mxu0 0
      %410 = vmatprep.subr.bf16.mxu0 0
      %411 = vmatpush1.bf16.msra.mxu0 0
      %412 = vmatprep.subr.bf16.mxu0 0
      %413 = vmatpush1.bf16.msra.mxu0 0
      %414 = vmatprep.subr.bf16.mxu0 0
      %415 = vmatpush1.bf16.msra.mxu0 0
      %416 = vmatprep.mubr.bf16.mxu0 0
      %417 = vmatmul.mubr.bf16.gmra.mrb[0].mxu0 %v382
      %v418 = vpop.f32.mrb[0].mxu0
      %v419 = vadd.f32 %v378, %v418
      %v420 = vpop.f32.mrb[0].mxu0
      %v421 = vadd.f32 %v378, %v420
      %v422 = vpop.f32.mrb[0].mxu0
      %v423 = vpop.f32.mrb[0].mxu0
      %424 = vdwg.mxu0
      %v425 = vmax.f32 %v419, 0.0
      %v426 = vmax.f32 %v421, 0.0
      %429 = vrot.lane.b32.xlu0 %v425, 68
      %v430 = vpop.permute.xlu0 %429
      %431 = vrot.lane.b32.xlu0 %v426, 68
      %v432 = vpop.permute.xlu0 %431
      %vm433 = vcmask 556032
      %v434 = vsel %vm433, %v430, %v432
      %v438 = vsel %vm433, 0.0, %v430
      %v439 = vsel %vm433, %v432, 0.0
      %v440 = vlaneseq
      %v441 = vand.u32 %v440, 127
      %v442 = vadd.s32 %v441, 128
      %vm443 = vcmp.lt.s32.totalorder %v441, 0
      %v444 = vsub.s32 0, %v441
      %v445 = vsel %vm443, %v444, %v441
      %v446 = vshrl.u32 %v445, 4
      %v447 = vand.u32 %v445, 15
      %v448 = vsub.s32 0, %v447
      %v449 = vsel %vm443, %v448, %v447
      %vm450 = vcmp.lt.s32.totalorder %v442, 0
      %v451 = vsub.s32 0, %v442
      %v452 = vsel %vm450, %v451, %v442
      %v453 = vshrl.u32 %v452, 4
      %v454 = vand.u32 %v452, 15
      %v455 = vsub.s32 0, %v454
      %v456 = vsel %vm450, %v455, %v454
      %vm457 = vcmp.ne.s32.totalorder %v449, 0
      %vm458 = vcmp.ne.s32.totalorder %v456, 0
      %vm459 = vcmp.lt.s32.totalorder %v449, 0
      %vm460 = vcmp.lt.s32.totalorder %v456, 0
      %vm461 = vmand %vm459, %vm457
      %vm462 = vmand %vm460, %vm458
      %v463 = vadd.s32 %v449, 16
      %v464 = vadd.s32 %v456, 16
      %v465 = vsel %vm461, %v463, %v449
      %v466 = vsel %vm462, %v464, %v456
      %vm467 = vcmp.ge.s32.totalorder %v465, 4
      %vm468 = vcmp.ge.s32.totalorder %v466, 4
      %vm469 = vcmp.ge.s32.totalorder %v465, 3
      %vm470 = vcmp.ge.s32.totalorder %v466, 3
      %vm471 = vcmp.ge.s32.totalorder %v465, 2
      %vm472 = vcmp.ge.s32.totalorder %v466, 2
      %vm473 = vcmp.ge.s32.totalorder %v465, 1
      %vm474 = vcmp.ge.s32.totalorder %v466, 1
      %vm475 = vcmp.lt.s32.totalorder %v465, 15
      %vm476 = vcmp.lt.s32.totalorder %v466, 15
      %vm477 = vcmp.lt.s32.totalorder %v465, 14
      %vm478 = vcmp.lt.s32.totalorder %v466, 14
      %vm479 = vcmp.lt.s32.totalorder %v465, 13
      %vm480 = vcmp.lt.s32.totalorder %v466, 13
      %vm481 = vcmp.lt.s32.totalorder %v465, 12
      %vm482 = vcmp.lt.s32.totalorder %v466, 12
      %v483 = vsel %vm481, 1, 0
      %v484 = vsel %vm482, 1, 0
      %vm485 = vcmp.eq.s32.totalorder %v483, 1
      %vm486 = vcmp.eq.s32.totalorder %v484, 1
      %489 = vrot.lane.b32.xlu0 %v438, 56
      %v490 = vpop.permute.xlu0 %489
      %491 = vrot.lane.b32.xlu0 %v434, 56
      %v492 = vpop.permute.xlu0 %491
      %493 = vrot.lane.b32.xlu0 %v439, 56
      %v494 = vpop.permute.xlu0 %493
      %vm495 = vcmask 457728
      %v496 = vsel %vm495, %v490, %v492
      %v497 = vsel %vm495, %v492, %v494
      %v500 = vsel %vm485, %v496, 0.0
      %v501 = vsel %vm486, %v497, 0.0
      %v502 = vsel %vm479, 1, 0
      %v503 = vsel %vm480, 1, 0
      %vm504 = vcmp.eq.s32.totalorder %v502, 1
      %vm505 = vcmp.eq.s32.totalorder %v503, 1
      %506 = vrot.lane.b32.xlu0 %v438, 57
      %v507 = vpop.permute.xlu0 %506
      %508 = vrot.lane.b32.xlu0 %v434, 57
      %v509 = vpop.permute.xlu0 %508
      %510 = vrot.lane.b32.xlu0 %v439, 57
      %v511 = vpop.permute.xlu0 %510
      %vm512 = vcmask 465920
      %v513 = vsel %vm512, %v507, %v509
      %v514 = vsel %vm512, %v509, %v511
      %v517 = vsel %vm504, %v513, 0.0
      %v518 = vsel %vm505, %v514, 0.0
      %v519 = vsel %vm477, 1, 0
      %v520 = vsel %vm478, 1, 0
      %vm521 = vcmp.eq.s32.totalorder %v519, 1
      %vm522 = vcmp.eq.s32.totalorder %v520, 1
      %523 = vrot.lane.b32.xlu0 %v438, 58
      %v524 = vpop.permute.xlu0 %523
      %525 = vrot.lane.b32.xlu0 %v434, 58
      %v526 = vpop.permute.xlu0 %525
      %527 = vrot.lane.b32.xlu0 %v439, 58
      %v528 = vpop.permute.xlu0 %527
      %vm529 = vcmask 474112
      %v530 = vsel %vm529, %v524, %v526
      %v531 = vsel %vm529, %v526, %v528
      %v534 = vsel %vm521, %v530, 0.0
      %v535 = vsel %vm522, %v531, 0.0
      %v536 = vsel %vm475, 1, 0
      %v537 = vsel %vm476, 1, 0
      %vm538 = vcmp.eq.s32.totalorder %v536, 1
      %vm539 = vcmp.eq.s32.totalorder %v537, 1
      %540 = vrot.lane.b32.xlu0 %v438, 59
      %v541 = vpop.permute.xlu0 %540
      %542 = vrot.lane.b32.xlu0 %v434, 59
      %v543 = vpop.permute.xlu0 %542
      %544 = vrot.lane.b32.xlu0 %v439, 59
      %v545 = vpop.permute.xlu0 %544
      %vm546 = vcmask 482304
      %v547 = vsel %vm546, %v541, %v543
      %v548 = vsel %vm546, %v543, %v545
      %v551 = vsel %vm538, %v547, 0.0
      %v552 = vsel %vm539, %v548, 0.0
      %v553 = vsel %vm473, 1, 0
      %v554 = vsel %vm474, 1, 0
      %vm555 = vcmp.eq.s32.totalorder %v553, 1
      %vm556 = vcmp.eq.s32.totalorder %v554, 1
      %557 = vrot.lane.b32.xlu0 %v438, 61
      %v558 = vpop.permute.xlu0 %557
      %559 = vrot.lane.b32.xlu0 %v434, 61
      %v560 = vpop.permute.xlu0 %559
      %561 = vrot.lane.b32.xlu0 %v439, 61
      %v562 = vpop.permute.xlu0 %561
      %vm563 = vcmask 498688
      %v564 = vsel %vm563, %v558, %v560
      %v565 = vsel %vm563, %v560, %v562
      %v568 = vsel %vm555, %v564, 0.0
      %v569 = vsel %vm556, %v565, 0.0
      %v570 = vsel %vm471, 1, 0
      %v571 = vsel %vm472, 1, 0
      %vm572 = vcmp.eq.s32.totalorder %v570, 1
      %vm573 = vcmp.eq.s32.totalorder %v571, 1
      %574 = vrot.lane.b32.xlu0 %v438, 62
      %v575 = vpop.permute.xlu0 %574
      %576 = vrot.lane.b32.xlu0 %v434, 62
      %v577 = vpop.permute.xlu0 %576
      %578 = vrot.lane.b32.xlu0 %v439, 62
      %v579 = vpop.permute.xlu0 %578
      %vm580 = vcmask 506880
      %v581 = vsel %vm580, %v575, %v577
      %v582 = vsel %vm580, %v577, %v579
      %v585 = vsel %vm572, %v581, 0.0
      %v586 = vsel %vm573, %v582, 0.0
      %v587 = vsel %vm469, 1, 0
      %v588 = vsel %vm470, 1, 0
      %vm589 = vcmp.eq.s32.totalorder %v587, 1
      %vm590 = vcmp.eq.s32.totalorder %v588, 1
      %591 = vrot.lane.b32.xlu0 %v438, 63
      %v592 = vpop.permute.xlu0 %591
      %593 = vrot.lane.b32.xlu0 %v434, 63
      %v594 = vpop.permute.xlu0 %593
      %595 = vrot.lane.b32.xlu0 %v439, 63
      %v596 = vpop.permute.xlu0 %595
      %vm597 = vcmask 515072
      %v598 = vsel %vm597, %v592, %v594
      %v599 = vsel %vm597, %v594, %v596
      %v602 = vsel %vm589, %v598, 0.0
      %v603 = vsel %vm590, %v599, 0.0
      %v604 = vsel %vm467, 1, 0
      %v605 = vsel %vm468, 1, 0
      %vm606 = vcmp.eq.s32.totalorder %v604, 1
      %vm607 = vcmp.eq.s32.totalorder %v605, 1
      %608 = vrot.lane.b32.xlu0 %v438, 64
      %v609 = vpop.permute.xlu0 %608
      %610 = vrot.lane.b32.xlu0 %v434, 64
      %v611 = vpop.permute.xlu0 %610
      %612 = vrot.lane.b32.xlu0 %v439, 64
      %v613 = vpop.permute.xlu0 %612
      %vm614 = vcmask 523264
      %v615 = vsel %vm614, %v609, %v611
      %v616 = vsel %vm614, %v611, %v613
      %v619 = vsel %vm606, %v615, 0.0
      %v620 = vsel %vm607, %v616, 0.0
      %v621 = vld [vmem:[%s3] sm:$0xf]
      %v622 = vpack.c.bf16 %v517, %v500
      %v623 = vpack.c.bf16 %v518, %v501
      %v624 = vpack.c.bf16 %v551, %v534
      %v625 = vpack.c.bf16 %v552, %v535
      %v626 = vpack.c.bf16 %v568, %v425
      %v627 = vpack.c.bf16 %v569, %v426
      %v628 = vpack.c.bf16 %v602, %v585
      %v629 = vpack.c.bf16 %v603, %v586
      %v630 = vpack.c.bf16 %v619, %v619
      %v631 = vpack.c.bf16 %v620, %v620
      %vm632 = vcmask 588800
      %v634 = vsel %vm632, %v621, 0
      %vm636 = vcmask 1043456
      %v638 = vsel %vm636, %v630, 0
      %v641 = vsel %vm636, %v631, 0
      %643 = vmatprep.subr.bf16.mxu0 %v623
      %644 = vmatpush1.bf16.msra.mxu0 %v622
      %645 = vmatprep.subr.bf16.mxu0 %v625
      %646 = vmatpush1.bf16.msra.mxu0 %v624
      %647 = vmatprep.subr.bf16.mxu0 %v627
      %648 = vmatpush1.bf16.msra.mxu0 %v626
      %649 = vmatprep.subr.bf16.mxu0 %v629
      %650 = vmatpush1.bf16.msra.mxu0 %v628
      %651 = vmatprep.subr.bf16.mxu0 %v641
      %652 = vmatpush1.bf16.msra.mxu0 %v638
      %653 = vmatprep.subr.bf16.mxu0 0
      %654 = vmatpush1.bf16.msra.mxu0 0
      %655 = vmatprep.subr.bf16.mxu0 0
      %656 = vmatpush1.bf16.msra.mxu0 0
      %657 = vmatprep.subr.bf16.mxu0 0
      %658 = vmatpush1.bf16.msra.mxu0 0
      %659 = vmatprep.subr.bf16.mxu0 0
      %660 = vmatpush1.bf16.msra.mxu0 0
      %661 = vmatprep.subr.bf16.mxu0 0
      %662 = vmatpush1.bf16.msra.mxu0 0
      %663 = vmatprep.subr.bf16.mxu0 0
      %664 = vmatpush1.bf16.msra.mxu0 0
      %665 = vmatprep.subr.bf16.mxu0 0
      %666 = vmatpush1.bf16.msra.mxu0 0
      %667 = vmatprep.subr.bf16.mxu0 0
      %668 = vmatpush1.bf16.msra.mxu0 0
      %669 = vmatprep.subr.bf16.mxu0 0
      %670 = vmatpush1.bf16.msra.mxu0 0
      %671 = vmatprep.subr.bf16.mxu0 0
      %672 = vmatpush1.bf16.msra.mxu0 0
      %673 = vmatprep.subr.bf16.mxu0 0
      %674 = vmatpush1.bf16.msra.mxu0 0
      %675 = vmatprep.mubr.bf16.mxu0 0
      %676 = vmatmul.mubr.bf16.gmra.mrb[0].mxu0 %v634
      %v677 = vpop.f32.mrb[0].mxu0
      %v678 = vadd.f32 0.0, %v677
      %v679 = vpop.f32.mrb[0].mxu0
      %v680 = vadd.f32 0.0, %v679
      %v681 = vpop.f32.mrb[0].mxu0
      %v682 = vpop.f32.mrb[0].mxu0
      %683 = vdwg.mxu0
      %684 = vrot.lane.b32.xlu0 %v438, 16
      %v685 = vpop.permute.xlu0 %684
      %686 = vrot.lane.b32.xlu0 %v434, 16
      %v687 = vpop.permute.xlu0 %686
      %688 = vrot.lane.b32.xlu0 %v439, 16
      %v689 = vpop.permute.xlu0 %688
      %vm690 = vcmask 130048
      %v691 = vsel %vm690, %v685, %v687
      %v692 = vsel %vm690, %v687, %v689
      %696 = vrot.lane.b32.xlu0 %v438, 32
      %v697 = vpop.permute.xlu0 %696
      %698 = vrot.lane.b32.xlu0 %v434, 32
      %v699 = vpop.permute.xlu0 %698
      %700 = vrot.lane.b32.xlu0 %v439, 32
      %v701 = vpop.permute.xlu0 %700
      %v702 = vsel %vm380, %v697, %v699
      %v703 = vsel %vm380, %v699, %v701
      %707 = vrot.lane.b32.xlu0 %v438, 48
      %v708 = vpop.permute.xlu0 %707
      %709 = vrot.lane.b32.xlu0 %v434, 48
      %v710 = vpop.permute.xlu0 %709
      %711 = vrot.lane.b32.xlu0 %v439, 48
      %v712 = vpop.permute.xlu0 %711
      %vm713 = vcmask 392192
      %v714 = vsel %vm713, %v708, %v710
      %v715 = vsel %vm713, %v710, %v712
      %719 = vrot.lane.b32.xlu0 %v425, 4
      %v720 = vpop.permute.xlu0 %719
      %721 = vrot.lane.b32.xlu0 %v426, 4
      %v722 = vpop.permute.xlu0 %721
      %vm723 = vcmask 31744
      %v724 = vsel %vm723, %v720, %v722
      %728 = vrot.lane.b32.xlu0 %v438, 80
      %v729 = vpop.permute.xlu0 %728
      %730 = vrot.lane.b32.xlu0 %v434, 80
      %v731 = vpop.permute.xlu0 %730
      %732 = vrot.lane.b32.xlu0 %v439, 80
      %v733 = vpop.permute.xlu0 %732
      %vm734 = vcmask 654336
      %v735 = vsel %vm734, %v729, %v731
      %v736 = vsel %vm734, %v731, %v733
      %740 = vrot.lane.b32.xlu0 %v438, 96
      %v741 = vpop.permute.xlu0 %740
      %742 = vrot.lane.b32.xlu0 %v434, 96
      %v743 = vpop.permute.xlu0 %742
      %744 = vrot.lane.b32.xlu0 %v439, 96
      %v745 = vpop.permute.xlu0 %744
      %vm746 = vcmask 785408
      %v747 = vsel %vm746, %v741, %v743
      %v748 = vsel %vm746, %v743, %v745
      %752 = vrot.lane.b32.xlu0 %v438, 112
      %v753 = vpop.permute.xlu0 %752
      %754 = vrot.lane.b32.xlu0 %v434, 112
      %v755 = vpop.permute.xlu0 %754
      %756 = vrot.lane.b32.xlu0 %v439, 112
      %v757 = vpop.permute.xlu0 %756
      %vm758 = vcmask 916480
      %v759 = vsel %vm758, %v753, %v755
      %v760 = vsel %vm758, %v755, %v757
      %v764 = vld [vmem:[%s4] sm:$0xf]
      %v765 = vpack.c.bf16 %v691, %v434
      %v766 = vpack.c.bf16 %v692, %v439
      %v767 = vpack.c.bf16 %v689, 0.0
      %v768 = vpack.c.bf16 %v714, %v702
      %v769 = vpack.c.bf16 %v715, %v703
      %v770 = vpack.c.bf16 %v712, %v701
      %v771 = vpack.c.bf16 %v735, %v720
      %v772 = vpack.c.bf16 %v736, %v724
      %v773 = vpack.c.bf16 %v733, %v722
      %v774 = vpack.c.bf16 %v759, %v747
      %v775 = vpack.c.bf16 %v760, %v748
      %v776 = vpack.c.bf16 %v757, %v745
      %v777 = vpack.c.bf16 %v438, %v438
      %v778 = vpack.c.bf16 %v434, %v434
      %v779 = vpack.c.bf16 %v439, %v439
      %795 = vrot.lane.b32.xlu0 %v765, 124
      %v796 = vpop.permute.xlu0 %795
      %797 = vrot.lane.b32.xlu0 %v766, 124
      %v798 = vpop.permute.xlu0 %797
      %799 = vrot.lane.b32.xlu0 %v767, 124
      %v800 = vpop.permute.xlu0 %799
      %801 = vrot.lane.b32.xlu0 %v768, 124
      %v802 = vpop.permute.xlu0 %801
      %803 = vrot.lane.b32.xlu0 %v769, 124
      %v804 = vpop.permute.xlu0 %803
      %805 = vrot.lane.b32.xlu0 %v770, 124
      %v806 = vpop.permute.xlu0 %805
      %807 = vrot.lane.b32.xlu0 %v771, 124
      %v808 = vpop.permute.xlu0 %807
      %809 = vrot.lane.b32.xlu0 %v772, 124
      %v810 = vpop.permute.xlu0 %809
      %811 = vrot.lane.b32.xlu0 %v773, 124
      %v812 = vpop.permute.xlu0 %811
      %813 = vrot.lane.b32.xlu0 %v774, 124
      %v814 = vpop.permute.xlu0 %813
      %815 = vrot.lane.b32.xlu0 %v775, 124
      %v816 = vpop.permute.xlu0 %815
      %817 = vrot.lane.b32.xlu0 %v776, 124
      %v818 = vpop.permute.xlu0 %817
      %819 = vrot.lane.b32.xlu0 %v777, 124
      %v820 = vpop.permute.xlu0 %819
      %821 = vrot.lane.b32.xlu0 %v778, 124
      %v822 = vpop.permute.xlu0 %821
      %823 = vrot.lane.b32.xlu0 %v779, 124
      %v824 = vpop.permute.xlu0 %823
      %vm825 = vcmask 1014784
      %v826 = vsel %vm825, %v796, %v798
      %v827 = vsel %vm825, %v798, %v800
      %v828 = vsel %vm825, %v802, %v804
      %v829 = vsel %vm825, %v804, %v806
      %v830 = vsel %vm825, %v808, %v810
      %v831 = vsel %vm825, %v810, %v812
      %v832 = vsel %vm825, %v814, %v816
      %v833 = vsel %vm825, %v816, %v818
      %v834 = vsel %vm825, %v820, %v822
      %v835 = vsel %vm825, %v822, %v824
      %v845 = vsel %vm632, %v764, 0
      %v848 = vsel %vm636, %v834, 0
      %v851 = vsel %vm636, %v835, 0
      %853 = vmatprep.subr.bf16.mxu0 %v827
      %854 = vmatpush1.bf16.msra.mxu0 %v826
      %855 = vmatprep.subr.bf16.mxu0 %v829
      %856 = vmatpush1.bf16.msra.mxu0 %v828
      %857 = vmatprep.subr.bf16.mxu0 %v831
      %858 = vmatpush1.bf16.msra.mxu0 %v830
      %859 = vmatprep.subr.bf16.mxu0 %v833
      %860 = vmatpush1.bf16.msra.mxu0 %v832
      %861 = vmatprep.subr.bf16.mxu0 %v851
      %862 = vmatpush1.bf16.msra.mxu0 %v848
      %863 = vmatprep.subr.bf16.mxu0 0
      %864 = vmatpush1.bf16.msra.mxu0 0
      %865 = vmatprep.subr.bf16.mxu0 0
      %866 = vmatpush1.bf16.msra.mxu0 0
      %867 = vmatprep.subr.bf16.mxu0 0
      %868 = vmatpush1.bf16.msra.mxu0 0
      %869 = vmatprep.subr.bf16.mxu0 0
      %870 = vmatpush1.bf16.msra.mxu0 0
      %871 = vmatprep.subr.bf16.mxu0 0
      %872 = vmatpush1.bf16.msra.mxu0 0
      %873 = vmatprep.subr.bf16.mxu0 0
      %874 = vmatpush1.bf16.msra.mxu0 0
      %875 = vmatprep.subr.bf16.mxu0 0
      %876 = vmatpush1.bf16.msra.mxu0 0
      %877 = vmatprep.subr.bf16.mxu0 0
      %878 = vmatpush1.bf16.msra.mxu0 0
      %879 = vmatprep.subr.bf16.mxu0 0
      %880 = vmatpush1.bf16.msra.mxu0 0
      %881 = vmatprep.subr.bf16.mxu0 0
      %882 = vmatpush1.bf16.msra.mxu0 0
      %883 = vmatprep.subr.bf16.mxu0 0
      %884 = vmatpush1.bf16.msra.mxu0 0
      %885 = vmatprep.mubr.bf16.mxu0 0
      %886 = vmatmul.mubr.bf16.gmra.mrb[0].mxu0 %v845
      %v887 = vpop.f32.mrb[0].mxu0
      %v888 = vadd.f32 0.0, %v887
      %v889 = vpop.f32.mrb[0].mxu0
      %v890 = vadd.f32 0.0, %v889
      %v891 = vpop.f32.mrb[0].mxu0
      %v892 = vpop.f32.mrb[0].mxu0
      %893 = vdwg.mxu0
      %v894 = vsel %vm606, %v434, 0.0
      %v895 = vsel %vm607, %v439, 0.0
      %896 = vrot.lane.b32.xlu0 %v438, 15
      %v897 = vpop.permute.xlu0 %896
      %898 = vrot.lane.b32.xlu0 %v434, 15
      %v899 = vpop.permute.xlu0 %898
      %900 = vrot.lane.b32.xlu0 %v439, 15
      %v901 = vpop.permute.xlu0 %900
      %vm902 = vcmask 121856
      %v903 = vsel %vm902, %v897, %v899
      %v904 = vsel %vm902, %v899, %v901
      %v907 = vsel %vm589, %v903, 0.0
      %v908 = vsel %vm590, %v904, 0.0
      %909 = vrot.lane.b32.xlu0 %v438, 30
      %v910 = vpop.permute.xlu0 %909
      %911 = vrot.lane.b32.xlu0 %v434, 30
      %v912 = vpop.permute.xlu0 %911
      %913 = vrot.lane.b32.xlu0 %v439, 30
      %v914 = vpop.permute.xlu0 %913
      %vm915 = vcmask 244736
      %v916 = vsel %vm915, %v910, %v912
      %v917 = vsel %vm915, %v912, %v914
      %v920 = vsel %vm572, %v916, 0.0
      %v921 = vsel %vm573, %v917, 0.0
      %922 = vrot.lane.b32.xlu0 %v438, 45
      %v923 = vpop.permute.xlu0 %922
      %924 = vrot.lane.b32.xlu0 %v434, 45
      %v925 = vpop.permute.xlu0 %924
      %926 = vrot.lane.b32.xlu0 %v439, 45
      %v927 = vpop.permute.xlu0 %926
      %vm928 = vcmask 367616
      %v929 = vsel %vm928, %v923, %v925
      %v930 = vsel %vm928, %v925, %v927
      %v933 = vsel %vm555, %v929, 0.0
      %v934 = vsel %vm556, %v930, 0.0
      %935 = vrot.lane.b32.xlu0 %v438, 75
      %v936 = vpop.permute.xlu0 %935
      %937 = vrot.lane.b32.xlu0 %v434, 75
      %v938 = vpop.permute.xlu0 %937
      %939 = vrot.lane.b32.xlu0 %v439, 75
      %v940 = vpop.permute.xlu0 %939
      %vm941 = vcmask 613376
      %v942 = vsel %vm941, %v936, %v938
      %v943 = vsel %vm941, %v938, %v940
      %v946 = vsel %vm538, %v942, 0.0
      %v947 = vsel %vm539, %v943, 0.0
      %948 = vrot.lane.b32.xlu0 %v438, 90
      %v949 = vpop.permute.xlu0 %948
      %950 = vrot.lane.b32.xlu0 %v434, 90
      %v951 = vpop.permute.xlu0 %950
      %952 = vrot.lane.b32.xlu0 %v439, 90
      %v953 = vpop.permute.xlu0 %952
      %vm954 = vcmask 736256
      %v955 = vsel %vm954, %v949, %v951
      %v956 = vsel %vm954, %v951, %v953
      %v959 = vsel %vm521, %v955, 0.0
      %v960 = vsel %vm522, %v956, 0.0
      %961 = vrot.lane.b32.xlu0 %v438, 105
      %v962 = vpop.permute.xlu0 %961
      %963 = vrot.lane.b32.xlu0 %v434, 105
      %v964 = vpop.permute.xlu0 %963
      %965 = vrot.lane.b32.xlu0 %v439, 105
      %v966 = vpop.permute.xlu0 %965
      %vm967 = vcmask 859136
      %v968 = vsel %vm967, %v962, %v964
      %v969 = vsel %vm967, %v964, %v966
      %v972 = vsel %vm504, %v968, 0.0
      %v973 = vsel %vm505, %v969, 0.0
      %974 = vrot.lane.b32.xlu0 %v438, 120
      %v975 = vpop.permute.xlu0 %974
      %976 = vrot.lane.b32.xlu0 %v434, 120
      %v977 = vpop.permute.xlu0 %976
      %978 = vrot.lane.b32.xlu0 %v439, 120
      %v979 = vpop.permute.xlu0 %978
      %vm980 = vcmask 982016
      %v981 = vsel %vm980, %v975, %v977
      %v982 = vsel %vm980, %v977, %v979
      %v985 = vsel %vm485, %v981, 0.0
      %v986 = vsel %vm486, %v982, 0.0
      %v987 = vld [vmem:[%s5] sm:$0xf]
      %v988 = vpack.c.bf16 %v907, %v894
      %v989 = vpack.c.bf16 %v908, %v895
      %v990 = vpack.c.bf16 %v933, %v920
      %v991 = vpack.c.bf16 %v934, %v921
      %v992 = vpack.c.bf16 %v946, %v425
      %v993 = vpack.c.bf16 %v947, %v426
      %v994 = vpack.c.bf16 %v972, %v959
      %v995 = vpack.c.bf16 %v973, %v960
      %v996 = vpack.c.bf16 %v985, %v985
      %v997 = vpack.c.bf16 %v986, %v986
      %v999 = vsel %vm632, %v987, 0
      %v1002 = vsel %vm636, %v996, 0
      %v1005 = vsel %vm636, %v997, 0
      %1007 = vmatprep.subr.bf16.mxu0 %v989
      %1008 = vmatpush1.bf16.msra.mxu0 %v988
      %1009 = vmatprep.subr.bf16.mxu0 %v991
      %1010 = vmatpush1.bf16.msra.mxu0 %v990
      %1011 = vmatprep.subr.bf16.mxu0 %v993
      %1012 = vmatpush1.bf16.msra.mxu0 %v992
      %1013 = vmatprep.subr.bf16.mxu0 %v995
      %1014 = vmatpush1.bf16.msra.mxu0 %v994
      %1015 = vmatprep.subr.bf16.mxu0 %v1005
      %1016 = vmatpush1.bf16.msra.mxu0 %v1002
      %1017 = vmatprep.subr.bf16.mxu0 0
      %1018 = vmatpush1.bf16.msra.mxu0 0
      %1019 = vmatprep.subr.bf16.mxu0 0
      %1020 = vmatpush1.bf16.msra.mxu0 0
      %1021 = vmatprep.subr.bf16.mxu0 0
      %1022 = vmatpush1.bf16.msra.mxu0 0
      %1023 = vmatprep.subr.bf16.mxu0 0
      %1024 = vmatpush1.bf16.msra.mxu0 0
      %1025 = vmatprep.subr.bf16.mxu0 0
      %1026 = vmatpush1.bf16.msra.mxu0 0
      %1027 = vmatprep.subr.bf16.mxu0 0
      %1028 = vmatpush1.bf16.msra.mxu0 0
      %1029 = vmatprep.subr.bf16.mxu0 0
      %1030 = vmatpush1.bf16.msra.mxu0 0
      %1031 = vmatprep.subr.bf16.mxu0 0
      %1032 = vmatpush1.bf16.msra.mxu0 0
      %1033 = vmatprep.subr.bf16.mxu0 0
      %1034 = vmatpush1.bf16.msra.mxu0 0
      %1035 = vmatprep.subr.bf16.mxu0 0
      %1036 = vmatpush1.bf16.msra.mxu0 0
      %1037 = vmatprep.subr.bf16.mxu0 0
      %1038 = vmatpush1.bf16.msra.mxu0 0
      %1039 = vmatprep.mubr.bf16.mxu0 0
      %1040 = vmatmul.mubr.bf16.gmra.mrb[0].mxu0 %v999
      %v1041 = vpop.f32.mrb[0].mxu0
      %v1042 = vadd.f32 0.0, %v1041
      %v1043 = vpop.f32.mrb[0].mxu0
      %v1044 = vadd.f32 0.0, %v1043
      %v1045 = vpop.f32.mrb[0].mxu0
      %v1046 = vpop.f32.mrb[0].mxu0
      %1047 = vdwg.mxu0
      %v1048 = vld [vmem:[%s6] sm:$0xf]
      %v1049 = vpack.c.bf16 %v972, %v985
      %v1050 = vpack.c.bf16 %v973, %v986
      %v1051 = vpack.c.bf16 %v946, %v959
      %v1052 = vpack.c.bf16 %v947, %v960
      %v1053 = vpack.c.bf16 %v933, %v425
      %v1054 = vpack.c.bf16 %v934, %v426
      %v1055 = vpack.c.bf16 %v907, %v920
      %v1056 = vpack.c.bf16 %v908, %v921
      %v1057 = vpack.c.bf16 %v894, %v894
      %v1058 = vpack.c.bf16 %v895, %v895
      %v1060 = vsel %vm632, %v1048, 0
      %v1063 = vsel %vm636, %v1057, 0
      %v1066 = vsel %vm636, %v1058, 0
      %1068 = vmatprep.subr.bf16.mxu0 %v1050
      %1069 = vmatpush1.bf16.msra.mxu0 %v1049
      %1070 = vmatprep.subr.bf16.mxu0 %v1052
      %1071 = vmatpush1.bf16.msra.mxu0 %v1051
      %1072 = vmatprep.subr.bf16.mxu0 %v1054
      %1073 = vmatpush1.bf16.msra.mxu0 %v1053
      %1074 = vmatprep.subr.bf16.mxu0 %v1056
      %1075 = vmatpush1.bf16.msra.mxu0 %v1055
      %1076 = vmatprep.subr.bf16.mxu0 %v1066
      %1077 = vmatpush1.bf16.msra.mxu0 %v1063
      %1078 = vmatprep.subr.bf16.mxu0 0
      %1079 = vmatpush1.bf16.msra.mxu0 0
      %1080 = vmatprep.subr.bf16.mxu0 0
      %1081 = vmatpush1.bf16.msra.mxu0 0
      %1082 = vmatprep.subr.bf16.mxu0 0
      %1083 = vmatpush1.bf16.msra.mxu0 0
      %1084 = vmatprep.subr.bf16.mxu0 0
      %1085 = vmatpush1.bf16.msra.mxu0 0
      %1086 = vmatprep.subr.bf16.mxu0 0
      %1087 = vmatpush1.bf16.msra.mxu0 0
      %1088 = vmatprep.subr.bf16.mxu0 0
      %1089 = vmatpush1.bf16.msra.mxu0 0
      %1090 = vmatprep.subr.bf16.mxu0 0
      %1091 = vmatpush1.bf16.msra.mxu0 0
      %1092 = vmatprep.subr.bf16.mxu0 0
      %1093 = vmatpush1.bf16.msra.mxu0 0
      %1094 = vmatprep.subr.bf16.mxu0 0
      %1095 = vmatpush1.bf16.msra.mxu0 0
      %1096 = vmatprep.subr.bf16.mxu0 0
      %1097 = vmatpush1.bf16.msra.mxu0 0
      %1098 = vmatprep.subr.bf16.mxu0 0
      %1099 = vmatpush1.bf16.msra.mxu0 0
      %1100 = vmatprep.mubr.bf16.mxu0 0
      %1101 = vmatmul.mubr.bf16.gmra.mrb[0].mxu0 %v1060
      %v1102 = vpop.f32.mrb[0].mxu0
      %v1103 = vadd.f32 0.0, %v1102
      %v1104 = vpop.f32.mrb[0].mxu0
      %v1105 = vadd.f32 0.0, %v1104
      %v1106 = vpop.f32.mrb[0].mxu0
      %v1107 = vpop.f32.mrb[0].mxu0
      %1108 = vdwg.mxu0
      %v1109 = vld [vmem:[%s7] sm:$0xff]
      %v1110 = vld [vmem:[%s7 + $0x8] sm:$0xff]
      %v1111 = vld [vmem:[%s7 + $0x10] sm:$0xff]
      %v1112 = vld [vmem:[%s7 + $0x18] sm:$0xff]
      %1114 = vset.pattern.permute.xlu0 0
      %1115 = vperm.xlu0 %1114, %v1109
      %v1116 = vpop.permute.xlu0 %1115
      %1119 = vset.pattern.permute.xlu0 0
      %1120 = vperm.xlu0 %1119, %v1110
      %v1121 = vpop.permute.xlu0 %1120
      %1124 = vset.pattern.permute.xlu0 0
      %1125 = vperm.xlu0 %1124, %v1111
      %v1126 = vpop.permute.xlu0 %1125
      %1129 = vset.pattern.permute.xlu0 0
      %1130 = vperm.xlu0 %1129, %v1112
      %v1131 = vpop.permute.xlu0 %1130
      %v1133 = vadd.f32 %v678, %v1116
      %v1134 = vadd.f32 %v680, %v1116
      %v1135 = vadd.f32 %v888, %v1121
      %v1136 = vadd.f32 %v890, %v1121
      %v1137 = vadd.f32 %v1042, %v1126
      %v1138 = vadd.f32 %v1044, %v1126
      %v1139 = vadd.f32 %v1103, %v1131
      %v1140 = vadd.f32 %v1105, %v1131
      %v1141 = vmax.f32 %v1133, 0.0
      %v1142 = vmax.f32 %v1134, 0.0
      %v1143 = vmax.f32 %v1135, 0.0
      %v1144 = vmax.f32 %v1136, 0.0
      %v1145 = vmax.f32 %v1137, 0.0
      %v1146 = vmax.f32 %v1138, 0.0
      %v1147 = vmax.f32 %v1139, 0.0
      %v1148 = vmax.f32 %v1140, 0.0
      %v1149 = vld [vmem:[%s8] sm:$0xf]
      %v1150 = vld [vmem:[%s8 + $0x4] sm:$0xf]
      %v1151 = vpack.c.bf16 %v1143, %v1141
      %v1152 = vpack.c.bf16 %v1144, %v1142
      %v1153 = vpack.c.bf16 %v1147, %v1145
      %v1154 = vpack.c.bf16 %v1148, %v1146
      %v1155 = vld [vmem:[%s9] sm:$0xff]
      %v1156 = vld [vmem:[%s9 + $0x8] sm:$0xff]
      %1158 = vset.pattern.permute.xlu0 0
      %1159 = vperm.xlu0 %1158, %v1155
      %v1160 = vpop.permute.xlu0 %1159
      %1163 = vset.pattern.permute.xlu0 0
      %1164 = vperm.xlu0 %1163, %v1156
      %v1165 = vpop.permute.xlu0 %1164
      %v1169 = vunpack.c.l.b16 %v1149
      %v1170 = vunpack.c.l.b16 %v1150
      %v1171 = vpack.c.b16 %v1170, %v1169
      %v1173 = vsel %vm380, %v1171, 0
      %1175 = vmatprep.subr.bf16.mxu0 %v1152
      %1176 = vmatpush1.bf16.msra.mxu0 %v1151
      %1177 = vmatprep.subr.bf16.mxu0 %v1154
      %1178 = vmatpush1.bf16.msra.mxu0 %v1153
      %1179 = vmatprep.subr.bf16.mxu0 0
      %1180 = vmatpush1.bf16.msra.mxu0 0
      %1181 = vmatprep.subr.bf16.mxu0 0
      %1182 = vmatpush1.bf16.msra.mxu0 0
      %1183 = vmatprep.subr.bf16.mxu0 0
      %1184 = vmatpush1.bf16.msra.mxu0 0
      %1185 = vmatprep.subr.bf16.mxu0 0
      %1186 = vmatpush1.bf16.msra.mxu0 0
      %1187 = vmatprep.subr.bf16.mxu0 0
      %1188 = vmatpush1.bf16.msra.mxu0 0
      %1189 = vmatprep.subr.bf16.mxu0 0
      %1190 = vmatpush1.bf16.msra.mxu0 0
      %1191 = vmatprep.subr.bf16.mxu0 0
      %1192 = vmatpush1.bf16.msra.mxu0 0
      %1193 = vmatprep.subr.bf16.mxu0 0
      %1194 = vmatpush1.bf16.msra.mxu0 0
      %1195 = vmatprep.subr.bf16.mxu0 0
      %1196 = vmatpush1.bf16.msra.mxu0 0
      %1197 = vmatprep.subr.bf16.mxu0 0
      %1198 = vmatpush1.bf16.msra.mxu0 0
      %1199 = vmatprep.subr.bf16.mxu0 0
      %1200 = vmatpush1.bf16.msra.mxu0 0
      %1201 = vmatprep.subr.bf16.mxu0 0
      %1202 = vmatpush1.bf16.msra.mxu0 0
      %1203 = vmatprep.subr.bf16.mxu0 0
      %1204 = vmatpush1.bf16.msra.mxu0 0
      %1205 = vmatprep.subr.bf16.mxu0 0
      %1206 = vmatpush1.bf16.msra.mxu0 0
      %1207 = vmatprep.mubr.bf16.mxu0 0
      %1208 = vmatmul.mubr.bf16.gmra.mrb[0].mxu0 %v1173
      %v1209 = vpop.f32.mrb[0].mxu0
      %v1210 = vadd.f32 %v1160, %v1209
      %v1211 = vpop.f32.mrb[0].mxu0
      %v1212 = vadd.f32 %v1160, %v1211
      %v1213 = vpop.f32.mrb[0].mxu0
      %v1214 = vadd.f32 %v1165, %v1213
      %v1215 = vpop.f32.mrb[0].mxu0
      %v1216 = vadd.f32 %v1165, %v1215
      %1217 = vdwg.mxu0
      %v1218 = vmax.f32 %v1210, 0.0
      %v1219 = vmax.f32 %v1212, 0.0
      %v1220 = vmax.f32 %v1214, 0.0
      %v1221 = vmax.f32 %v1216, 0.0
      %1222 = vst [vmem:[%s359] sm:$0xff] %v1218
      %1223 = vst [vmem:[%s359 + $0x8] sm:$0xff] %v1219
      %1224 = vst [vmem:[%s359 + $0x10] sm:$0xff] %v1220
      %1225 = vst [vmem:[%s359 + $0x18] sm:$0xff] %v1221
      %p1226 = scmp.lt.s32.totalorder %s21, 1
      %s1227 = scalar_select %p1226, %s21, 1
      %s1228 = smul.addr %s1227, 4
      %s1229 = smul.addr %s1228, 8
      %s1230 = scalar_lea.vmem %s10, %s1229
      // Predicated region
      $region61: #{decoder_forward.1} parent=59 // pred_check
        %p1231 = pneg %p254
      $region62: #{decoder_forward.1} parent=59 // pred_check_branch
        %1233 = sbr.rel (%p1231) target = $region64
      $region63: #{decoder_forward.1} parent=59 // pred_region
        _
      $region64: #{decoder_forward.1} parent=59 // pred_fallthru
        _
    $region60: #{decoder_forward.1} parent=5 // pred_fallthru
      _
    %p1234 = scmp.le.s32.totalorder 2, %s16
    // Predicated region
    $region65: #{decoder_forward.1} parent=5 // pred_check
      %p1235 = pneg %p1234
    $region66: #{decoder_forward.1} parent=5 // pred_check_branch
      %1237 = sbr.rel (%p1235) target = $region68
    $region67: #{decoder_forward.1} parent=5 // pred_region
      %s1238 = ssub.s32 %s16, 2
      // Predicated region
      $region69: #{decoder_forward.1} parent=67 // pred_check
        %p1239 = pneg %p260
      $region70: #{decoder_forward.1} parent=67 // pred_check_branch
        %1241 = sbr.rel (%p1239) target = $region72
      $region71: #{decoder_forward.1} parent=67 // pred_region
        %p1242 = scmp.lt.s32.totalorder %s22, 1
        %s1243 = scalar_select %p1242, %s22, 1
        %s1244 = smul.addr %s1243, 4
        %s1245 = smul.addr %s1244, 8
        %s1246 = scalar_lea.vmem %s10, %s1245
      $region72: #{decoder_forward.1} parent=67 // pred_fallthru
        _
    $region68: #{decoder_forward.1} parent=5 // pred_fallthru
      _
  $region6: #{decoder_forward.1} parent=0 // loop_footer
    %s20 = sadd.s32 1, %s16
  $region7: #{decoder_forward.1} parent=0 // loop_footer_branch
    %15 = sbr.rel target = $region3
  $region8: #{decoder_forward.1} parent=0 // loop_exit
    _

</llo_original>
